<compile_context>
chip_gen: v5e
topology: v5e:2x2
jax: 0.10.0
libtpu: 0.0.40
codegen_flags: <defaults>
</compile_context>

<pallas_src>
import functools

import jax
import jax.numpy as jnp
from jax.experimental import pallas as pl
from jax.experimental.pallas import tpu as pltpu

# encoder: 784->128->64->12->3 (tanh after all but last)
# decoder: 3->12->64->128->784 (tanh after all but last, sigmoid at the end)
ENC_DIMS = [28 * 28, 128, 64, 12, 3]
DEC_DIMS = [3, 12, 64, 128, 28 * 28]
F_IN = ENC_DIMS[0]      # 784


def _round_up(n, m):
    return (n + m - 1) // m * m


def _autoencoder_kernel(x_ref,
                        # encoder weights / biases
                        we1, we2, we3, we4, be1, be2, be3, be4,
                        # decoder weights / biases
                        wd1, wd2, wd3, wd4, bd1, bd2, bd3, bd4,
                        enc_ref, dec_ref):
    def lin(h, w_ref, b_ref):
        # bf16 x bf16 matmul, f32 accumulation on the MXU, bias add in f32.
        return jnp.dot(h, w_ref[...], preferred_element_type=jnp.float32) + b_ref[...]

    h = x_ref[...].astype(jnp.bfloat16)                      # [bb, 784] bf16

    # ---- encoder ----
    h = jnp.tanh(lin(h, we1, be1)).astype(jnp.bfloat16)      # [bb, 128]
    h = jnp.tanh(lin(h, we2, be2)).astype(jnp.bfloat16)      # [bb, 64]
    h = jnp.tanh(lin(h, we3, be3)).astype(jnp.bfloat16)      # [bb, 12]
    z = lin(h, we4, be4)                                     # f32 [bb, 3]
    enc_ref[...] = z.astype(enc_ref.dtype)

    # ---- decoder ----
    d = z.astype(jnp.bfloat16)
    d = jnp.tanh(lin(d, wd1, bd1)).astype(jnp.bfloat16)      # [bb, 12]
    d = jnp.tanh(lin(d, wd2, bd2)).astype(jnp.bfloat16)      # [bb, 64]
    d = jnp.tanh(lin(d, wd3, bd3)).astype(jnp.bfloat16)      # [bb, 128]
    d = lin(d, wd4, bd4)                                     # f32 [bb, 784]
    dec_ref[...] = jax.nn.sigmoid(d).astype(dec_ref.dtype)   # bf16 store


def _full_spec(shape):
    zeros = (0,) * len(shape)
    return pl.BlockSpec(shape, lambda i: zeros)


@functools.partial(jax.jit, static_argnames=("block_b",))
def autoencoder_forward(x, params, block_b=1024):
    """x: [B, 784] float32.

    Returns (encoded [B, 3] f32, decoded [B, 784] bf16).
    """
    B, F = x.shape
    assert F == F_IN

    # Batch tile: multiple of 16 (bf16 sublane packing), capped at block_b and
    # at ceil(B/2) so the grid has >= 2 steps (v7x megacore gets both cores).
    bb = min(block_b, _round_up(pl.cdiv(B, 2), 16))
    bb = max(16, _round_up(bb, 16))
    grid = pl.cdiv(B, bb)    # partial last block handled by Pallas (masked I/O)

    (we, be), (wd, bd) = params["enc"], params["dec"]

    # bf16 weights, (1, n) f32 biases; all stay resident in VMEM.
    we_bf = [w.astype(jnp.bfloat16) for w in we]
    wd_bf = [w.astype(jnp.bfloat16) for w in wd]
    be_f = [b.reshape(1, -1).astype(jnp.float32) for b in be]
    bd_f = [b.reshape(1, -1).astype(jnp.float32) for b in bd]

    weight_args = we_bf + be_f + wd_bf + bd_f

    in_specs = [pl.BlockSpec((bb, F_IN), lambda i: (i, 0))]
    in_specs += [_full_spec(w.shape) for w in weight_args]

    out_shape = (
        jax.ShapeDtypeStruct((B, ENC_DIMS[-1]), jnp.float32),
        jax.ShapeDtypeStruct((B, F_IN), jnp.bfloat16),
    )
    out_specs = (
        pl.BlockSpec((bb, ENC_DIMS[-1]), lambda i: (i, 0)),
        pl.BlockSpec((bb, F_IN), lambda i: (i, 0)),
    )

    macs = sum(ENC_DIMS[i] * ENC_DIMS[i + 1] + DEC_DIMS[i] * DEC_DIMS[i + 1]
               for i in range(4))
    cost = pl.CostEstimate(
        flops=2 * B * macs,                                   # enc + dec
        transcendentals=B * (2 * (128 + 64 + 12) + F_IN),     # tanh + sigmoid
        bytes_accessed=B * (F_IN * 4 + F_IN * 2 + ENC_DIMS[-1] * 4)
        + sum(int(w.size) * 2 for w in we_bf + wd_bf)
        + sum(int(b.size) * 4 for b in be_f + bd_f),
    )

    enc, dec = pl.pallas_call(
        _autoencoder_kernel,
        out_shape=out_shape,
        grid_spec=pltpu.PrefetchScalarGridSpec(
            num_scalar_prefetch=0,
            grid=(grid,),
            in_specs=in_specs,
            out_specs=out_specs,
        ),
        compiler_params=pltpu.CompilerParams(
            dimension_semantics=("parallel",),
            vmem_limit_bytes=48 * 1024 * 1024),
        cost_estimate=cost,
    )(x, *weight_args)

    return enc, dec


def init_params(key):
    """Deterministic init.  Weights stored as [in, out] (transposed vs torch)."""
    def init_layer(k, fan_in, fan_out):
        kw, kb = jax.random.split(k)
        # mimic torch Linear default: U(-1/sqrt(fan_in), 1/sqrt(fan_in))
        bound = 1.0 / jnp.sqrt(float(fan_in))
        w = jax.random.uniform(kw, (fan_in, fan_out), jnp.float32, -bound, bound)
        b = jax.random.uniform(kb, (fan_out,), jnp.float32, -bound, bound)
        return w, b

    keys = jax.random.split(key, 8)
    enc_w, enc_b, dec_w, dec_b = [], [], [], []
    for i in range(4):
        w, b = init_layer(keys[i], ENC_DIMS[i], ENC_DIMS[i + 1])
        enc_w.append(w); enc_b.append(b)
    for i in range(4):
        w, b = init_layer(keys[4 + i], DEC_DIMS[i], DEC_DIMS[i + 1])
        dec_w.append(w); dec_b.append(b)
    return {"enc": (tuple(enc_w), tuple(enc_b)),
            "dec": (tuple(dec_w), tuple(dec_b))}


def reference_forward(x, params):
    (we, be), (wd, bd) = params["enc"], params["dec"]
    h = x
    for i in range(3):
        h = jnp.tanh(h @ we[i] + be[i])
    z = h @ we[3] + be[3]
    d = z
    for i in range(3):
        d = jnp.tanh(d @ wd[i] + bd[i])
    d = jax.nn.sigmoid(d @ wd[3] + bd[3])
    return z, d


if __name__ == "__main__":
    key = jax.random.PRNGKey(0)
    k_param, k_x = jax.random.split(key)

    params = init_params(k_param)

    # Small correctness check (bb clamps to 16 -> 2 grid steps, divisible).
    B = 32
    x = jax.random.uniform(k_x, (B, F_IN), jnp.float32)
    enc, dec = jax.block_until_ready(autoencoder_forward(x, params))
    enc_ref, dec_ref = reference_forward(x, params)
    assert enc.shape == (B, 3) and dec.shape == (B, F_IN)
    # bf16 weights/activations + bf16 decoded output -> loosened tolerance.
    assert jnp.allclose(enc, enc_ref, atol=3e-2, rtol=3e-2)
    assert jnp.allclose(dec.astype(jnp.float32), dec_ref, atol=3e-2, rtol=3e-2)

    # Multi-step grid with a ragged (partial) last block: B=200, bb=112.
    B2 = 200
    x2 = jax.random.uniform(jax.random.PRNGKey(1), (B2, F_IN), jnp.float32)
    enc2, dec2 = jax.block_until_ready(
        autoencoder_forward(x2, params, block_b=128))
    enc2_ref, dec2_ref = reference_forward(x2, params)
    assert enc2.shape == (B2, 3) and dec2.shape == (B2, F_IN)
    assert jnp.allclose(enc2, enc2_ref, atol=3e-2, rtol=3e-2)
    assert jnp.allclose(dec2.astype(jnp.float32), dec2_ref, atol=3e-2, rtol=3e-2)

    print("KERNEL_OK")
</pallas_src>

<mosaic_0001>
module attributes {stable_mosaic.version = 11 : i64} {
  func.func @_autoencoder_kernel(%arg0: i32, %arg1: memref<16x784xf32, #tpu.memory_space<vmem>>, %arg2: memref<784x128xbf16, #tpu.memory_space<vmem>>, %arg3: memref<128x64xbf16, #tpu.memory_space<vmem>>, %arg4: memref<64x12xbf16, #tpu.memory_space<vmem>>, %arg5: memref<12x3xbf16, #tpu.memory_space<vmem>>, %arg6: memref<1x128xf32, #tpu.memory_space<vmem>>, %arg7: memref<1x64xf32, #tpu.memory_space<vmem>>, %arg8: memref<1x12xf32, #tpu.memory_space<vmem>>, %arg9: memref<1x3xf32, #tpu.memory_space<vmem>>, %arg10: memref<3x12xbf16, #tpu.memory_space<vmem>>, %arg11: memref<12x64xbf16, #tpu.memory_space<vmem>>, %arg12: memref<64x128xbf16, #tpu.memory_space<vmem>>, %arg13: memref<128x784xbf16, #tpu.memory_space<vmem>>, %arg14: memref<1x12xf32, #tpu.memory_space<vmem>>, %arg15: memref<1x64xf32, #tpu.memory_space<vmem>>, %arg16: memref<1x128xf32, #tpu.memory_space<vmem>>, %arg17: memref<1x784xf32, #tpu.memory_space<vmem>>, %arg18: memref<16x3xf32, #tpu.memory_space<vmem>>, %arg19: memref<16x784xbf16, #tpu.memory_space<vmem>>) attributes {dimension_semantics = [#tpu.dimension_semantics<parallel>], iteration_bounds = array<i64: 2>, scalar_prefetch = 0 : i64, scratch_operands = 0 : i64, tpu.core_type = #tpu.core_type<tc>, window_params = [{transform_indices = @transform_0, window_bounds = array<i64: 16, 784>}, {pipeline_mode = #tpu.pipeline_mode<synchronous>, transform_indices = @transform_1, window_bounds = array<i64: 784, 128>}, {pipeline_mode = #tpu.pipeline_mode<synchronous>, transform_indices = @transform_2, window_bounds = array<i64: 128, 64>}, {pipeline_mode = #tpu.pipeline_mode<synchronous>, transform_indices = @transform_3, window_bounds = array<i64: 64, 12>}, {pipeline_mode = #tpu.pipeline_mode<synchronous>, transform_indices = @transform_4, window_bounds = array<i64: 12, 3>}, {pipeline_mode = #tpu.pipeline_mode<synchronous>, transform_indices = @transform_5, window_bounds = array<i64: 1, 128>}, {pipeline_mode = #tpu.pipeline_mode<synchronous>, transform_indices = @transform_6, window_bounds = array<i64: 1, 64>}, {pipeline_mode = #tpu.pipeline_mode<synchronous>, transform_indices = @transform_7, window_bounds = array<i64: 1, 12>}, {pipeline_mode = #tpu.pipeline_mode<synchronous>, transform_indices = @transform_8, window_bounds = array<i64: 1, 3>}, {pipeline_mode = #tpu.pipeline_mode<synchronous>, transform_indices = @transform_9, window_bounds = array<i64: 3, 12>}, {pipeline_mode = #tpu.pipeline_mode<synchronous>, transform_indices = @transform_10, window_bounds = array<i64: 12, 64>}, {pipeline_mode = #tpu.pipeline_mode<synchronous>, transform_indices = @transform_11, window_bounds = array<i64: 64, 128>}, {pipeline_mode = #tpu.pipeline_mode<synchronous>, transform_indices = @transform_12, window_bounds = array<i64: 128, 784>}, {pipeline_mode = #tpu.pipeline_mode<synchronous>, transform_indices = @transform_13, window_bounds = array<i64: 1, 12>}, {pipeline_mode = #tpu.pipeline_mode<synchronous>, transform_indices = @transform_14, window_bounds = array<i64: 1, 64>}, {pipeline_mode = #tpu.pipeline_mode<synchronous>, transform_indices = @transform_15, window_bounds = array<i64: 1, 128>}, {pipeline_mode = #tpu.pipeline_mode<synchronous>, transform_indices = @transform_16, window_bounds = array<i64: 1, 784>}, {transform_indices = @transform_17, window_bounds = array<i64: 16, 3>}, {transform_indices = @transform_18, window_bounds = array<i64: 16, 784>}]} {
    %c0 = arith.constant 0 : index
    %c0_0 = arith.constant 0 : index
    %0 = vector.load %arg1[%c0, %c0_0] : memref<16x784xf32, #tpu.memory_space<vmem>>, vector<16x784xf32>
    %1 = arith.truncf %0 : vector<16x784xf32> to vector<16x784xbf16>
    %c0_1 = arith.constant 0 : index
    %c0_2 = arith.constant 0 : index
    %2 = vector.load %arg2[%c0_1, %c0_2] : memref<784x128xbf16, #tpu.memory_space<vmem>>, vector<784x128xbf16>
    %cst = arith.constant dense<0.000000e+00> : vector<16x128xf32>
    %3 = tpu.matmul %1, %2, %cst {dimension_numbers = #tpu.dot_dimension_numbers<[1], [0], [0], [1], [0, 0, 1, 1], [], []>} : vector<16x784xbf16>, vector<784x128xbf16>, vector<16x128xf32> -> vector<16x128xf32>
    %c0_3 = arith.constant 0 : index
    %c0_4 = arith.constant 0 : index
    %4 = vector.load %arg6[%c0_3, %c0_4] : memref<1x128xf32, #tpu.memory_space<vmem>>, vector<1x128xf32>
    %5 = vector.broadcast %4 : vector<1x128xf32> to vector<16x128xf32>
    %6 = arith.addf %3, %5 : vector<16x128xf32>
    %7 = math.tanh %6 : vector<16x128xf32>
    %8 = arith.truncf %7 : vector<16x128xf32> to vector<16x128xbf16>
    %c0_5 = arith.constant 0 : index
    %c0_6 = arith.constant 0 : index
    %9 = vector.load %arg3[%c0_5, %c0_6] : memref<128x64xbf16, #tpu.memory_space<vmem>>, vector<128x64xbf16>
    %cst_7 = arith.constant dense<0.000000e+00> : vector<16x64xf32>
    %10 = tpu.matmul %8, %9, %cst_7 {dimension_numbers = #tpu.dot_dimension_numbers<[1], [0], [0], [1], [0, 0, 1, 1], [], []>} : vector<16x128xbf16>, vector<128x64xbf16>, vector<16x64xf32> -> vector<16x64xf32>
    %c0_8 = arith.constant 0 : index
    %c0_9 = arith.constant 0 : index
    %11 = vector.load %arg7[%c0_8, %c0_9] : memref<1x64xf32, #tpu.memory_space<vmem>>, vector<1x64xf32>
    %12 = vector.broadcast %11 : vector<1x64xf32> to vector<16x64xf32>
    %13 = arith.addf %10, %12 : vector<16x64xf32>
    %14 = math.tanh %13 : vector<16x64xf32>
    %15 = arith.truncf %14 : vector<16x64xf32> to vector<16x64xbf16>
    %c0_10 = arith.constant 0 : index
    %c0_11 = arith.constant 0 : index
    %16 = vector.load %arg4[%c0_10, %c0_11] : memref<64x12xbf16, #tpu.memory_space<vmem>>, vector<64x12xbf16>
    %cst_12 = arith.constant dense<0.000000e+00> : vector<16x12xf32>
    %17 = tpu.matmul %15, %16, %cst_12 {dimension_numbers = #tpu.dot_dimension_numbers<[1], [0], [0], [1], [0, 0, 1, 1], [], []>} : vector<16x64xbf16>, vector<64x12xbf16>, vector<16x12xf32> -> vector<16x12xf32>
    %c0_13 = arith.constant 0 : index
    %c0_14 = arith.constant 0 : index
    %18 = vector.load %arg8[%c0_13, %c0_14] : memref<1x12xf32, #tpu.memory_space<vmem>>, vector<1x12xf32>
    %19 = vector.broadcast %18 : vector<1x12xf32> to vector<16x12xf32>
    %20 = arith.addf %17, %19 : vector<16x12xf32>
    %21 = math.tanh %20 : vector<16x12xf32>
    %22 = arith.truncf %21 : vector<16x12xf32> to vector<16x12xbf16>
    %c0_15 = arith.constant 0 : index
    %c0_16 = arith.constant 0 : index
    %23 = vector.load %arg5[%c0_15, %c0_16] : memref<12x3xbf16, #tpu.memory_space<vmem>>, vector<12x3xbf16>
    %cst_17 = arith.constant dense<0.000000e+00> : vector<16x3xf32>
    %24 = tpu.matmul %22, %23, %cst_17 {dimension_numbers = #tpu.dot_dimension_numbers<[1], [0], [0], [1], [0, 0, 1, 1], [], []>} : vector<16x12xbf16>, vector<12x3xbf16>, vector<16x3xf32> -> vector<16x3xf32>
    %c0_18 = arith.constant 0 : index
    %c0_19 = arith.constant 0 : index
    %25 = vector.load %arg9[%c0_18, %c0_19] : memref<1x3xf32, #tpu.memory_space<vmem>>, vector<1x3xf32>
    %26 = vector.broadcast %25 : vector<1x3xf32> to vector<16x3xf32>
    %27 = arith.addf %24, %26 : vector<16x3xf32>
    %c0_20 = arith.constant 0 : index
    %c0_21 = arith.constant 0 : index
    %28 = vector.load %arg18[%c0_20, %c0_21] : memref<16x3xf32, #tpu.memory_space<vmem>>, vector<16x3xf32>
    tpu.vector_store %arg18[%c0_20, %c0_21], %27 {strides = array<i32>} : memref<16x3xf32, #tpu.memory_space<vmem>>, vector<16x3xf32>,
    %29 = arith.truncf %27 : vector<16x3xf32> to vector<16x3xbf16>
    %c0_22 = arith.constant 0 : index
    %c0_23 = arith.constant 0 : index
    %30 = vector.load %arg10[%c0_22, %c0_23] : memref<3x12xbf16, #tpu.memory_space<vmem>>, vector<3x12xbf16>
    %cst_24 = arith.constant dense<0.000000e+00> : vector<16x12xf32>
    %31 = tpu.matmul %29, %30, %cst_24 {dimension_numbers = #tpu.dot_dimension_numbers<[1], [0], [0], [1], [0, 0, 1, 1], [], []>} : vector<16x3xbf16>, vector<3x12xbf16>, vector<16x12xf32> -> vector<16x12xf32>
    %c0_25 = arith.constant 0 : index
    %c0_26 = arith.constant 0 : index
    %32 = vector.load %arg14[%c0_25, %c0_26] : memref<1x12xf32, #tpu.memory_space<vmem>>, vector<1x12xf32>
    %33 = vector.broadcast %32 : vector<1x12xf32> to vector<16x12xf32>
    %34 = arith.addf %31, %33 : vector<16x12xf32>
    %35 = math.tanh %34 : vector<16x12xf32>
    %36 = arith.truncf %35 : vector<16x12xf32> to vector<16x12xbf16>
    %c0_27 = arith.constant 0 : index
    %c0_28 = arith.constant 0 : index
    %37 = vector.load %arg11[%c0_27, %c0_28] : memref<12x64xbf16, #tpu.memory_space<vmem>>, vector<12x64xbf16>
    %cst_29 = arith.constant dense<0.000000e+00> : vector<16x64xf32>
    %38 = tpu.matmul %36, %37, %cst_29 {dimension_numbers = #tpu.dot_dimension_numbers<[1], [0], [0], [1], [0, 0, 1, 1], [], []>} : vector<16x12xbf16>, vector<12x64xbf16>, vector<16x64xf32> -> vector<16x64xf32>
    %c0_30 = arith.constant 0 : index
    %c0_31 = arith.constant 0 : index
    %39 = vector.load %arg15[%c0_30, %c0_31] : memref<1x64xf32, #tpu.memory_space<vmem>>, vector<1x64xf32>
    %40 = vector.broadcast %39 : vector<1x64xf32> to vector<16x64xf32>
    %41 = arith.addf %38, %40 : vector<16x64xf32>
    %42 = math.tanh %41 : vector<16x64xf32>
    %43 = arith.truncf %42 : vector<16x64xf32> to vector<16x64xbf16>
    %c0_32 = arith.constant 0 : index
    %c0_33 = arith.constant 0 : index
    %44 = vector.load %arg12[%c0_32, %c0_33] : memref<64x128xbf16, #tpu.memory_space<vmem>>, vector<64x128xbf16>
    %cst_34 = arith.constant dense<0.000000e+00> : vector<16x128xf32>
    %45 = tpu.matmul %43, %44, %cst_34 {dimension_numbers = #tpu.dot_dimension_numbers<[1], [0], [0], [1], [0, 0, 1, 1], [], []>} : vector<16x64xbf16>, vector<64x128xbf16>, vector<16x128xf32> -> vector<16x128xf32>
    %c0_35 = arith.constant 0 : index
    %c0_36 = arith.constant 0 : index
    %46 = vector.load %arg16[%c0_35, %c0_36] : memref<1x128xf32, #tpu.memory_space<vmem>>, vector<1x128xf32>
    %47 = vector.broadcast %46 : vector<1x128xf32> to vector<16x128xf32>
    %48 = arith.addf %45, %47 : vector<16x128xf32>
    %49 = math.tanh %48 : vector<16x128xf32>
    %50 = arith.truncf %49 : vector<16x128xf32> to vector<16x128xbf16>
    %c0_37 = arith.constant 0 : index
    %c0_38 = arith.constant 0 : index
    %51 = vector.load %arg13[%c0_37, %c0_38] : memref<128x784xbf16, #tpu.memory_space<vmem>>, vector<128x784xbf16>
    %cst_39 = arith.constant dense<0.000000e+00> : vector<16x784xf32>
    %52 = tpu.matmul %50, %51, %cst_39 {dimension_numbers = #tpu.dot_dimension_numbers<[1], [0], [0], [1], [0, 0, 1, 1], [], []>} : vector<16x128xbf16>, vector<128x784xbf16>, vector<16x784xf32> -> vector<16x784xf32>
    %c0_40 = arith.constant 0 : index
    %c0_41 = arith.constant 0 : index
    %53 = vector.load %arg17[%c0_40, %c0_41] : memref<1x784xf32, #tpu.memory_space<vmem>>, vector<1x784xf32>
    %54 = vector.broadcast %53 : vector<1x784xf32> to vector<16x784xf32>
    %55 = arith.addf %52, %54 : vector<16x784xf32>
    %56 = arith.negf %55 : vector<16x784xf32>
    %57 = math.exp %56 : vector<16x784xf32>
    %cst_42 = arith.constant 1.000000e+00 : f32
    %58 = vector.broadcast %cst_42 : f32 to vector<16x784xf32>
    %59 = arith.addf %58, %57 : vector<16x784xf32>
    %60 = arith.divf %58, %59 : vector<16x784xf32>
    %61 = arith.truncf %60 : vector<16x784xf32> to vector<16x784xbf16>
    %c0_43 = arith.constant 0 : index
    %c0_44 = arith.constant 0 : index
    %62 = vector.load %arg19[%c0_43, %c0_44] : memref<16x784xbf16, #tpu.memory_space<vmem>>, vector<16x784xbf16>
    tpu.vector_store %arg19[%c0_43, %c0_44], %61 {strides = array<i32>} : memref<16x784xbf16, #tpu.memory_space<vmem>>, vector<16x784xbf16>,
    return
  }
  func.func @transform_0(%arg0: i32) -> (i32, i32) {
    %c0_i32 = arith.constant 0 : i32
    %c0_i32_0 = arith.constant 0 : i32
    return %arg0, %c0_i32 : i32, i32
  }
  func.func @transform_1(%arg0: i32) -> (i32, i32) {
    %c0_i32 = arith.constant 0 : i32
    %c0_i32_0 = arith.constant 0 : i32
    %c0_i32_1 = arith.constant 0 : i32
    return %c0_i32, %c0_i32_0 : i32, i32
  }
  func.func @transform_2(%arg0: i32) -> (i32, i32) {
    %c0_i32 = arith.constant 0 : i32
    %c0_i32_0 = arith.constant 0 : i32
    %c0_i32_1 = arith.constant 0 : i32
    return %c0_i32, %c0_i32_0 : i32, i32
  }
  func.func @transform_3(%arg0: i32) -> (i32, i32) {
    %c0_i32 = arith.constant 0 : i32
    %c0_i32_0 = arith.constant 0 : i32
    %c0_i32_1 = arith.constant 0 : i32
    return %c0_i32, %c0_i32_0 : i32, i32
  }
  func.func @transform_4(%arg0: i32) -> (i32, i32) {
    %c0_i32 = arith.constant 0 : i32
    %c0_i32_0 = arith.constant 0 : i32
    %c0_i32_1 = arith.constant 0 : i32
    return %c0_i32, %c0_i32_0 : i32, i32
  }
  func.func @transform_5(%arg0: i32) -> (i32, i32) {
    %c0_i32 = arith.constant 0 : i32
    %c0_i32_0 = arith.constant 0 : i32
    %c0_i32_1 = arith.constant 0 : i32
    return %c0_i32, %c0_i32_0 : i32, i32
  }
  func.func @transform_6(%arg0: i32) -> (i32, i32) {
    %c0_i32 = arith.constant 0 : i32
    %c0_i32_0 = arith.constant 0 : i32
    %c0_i32_1 = arith.constant 0 : i32
    return %c0_i32, %c0_i32_0 : i32, i32
  }
  func.func @transform_7(%arg0: i32) -> (i32, i32) {
    %c0_i32 = arith.constant 0 : i32
    %c0_i32_0 = arith.constant 0 : i32
    %c0_i32_1 = arith.constant 0 : i32
    return %c0_i32, %c0_i32_0 : i32, i32
  }
  func.func @transform_8(%arg0: i32) -> (i32, i32) {
    %c0_i32 = arith.constant 0 : i32
    %c0_i32_0 = arith.constant 0 : i32
    %c0_i32_1 = arith.constant 0 : i32
    return %c0_i32, %c0_i32_0 : i32, i32
  }
  func.func @transform_9(%arg0: i32) -> (i32, i32) {
    %c0_i32 = arith.constant 0 : i32
    %c0_i32_0 = arith.constant 0 : i32
    %c0_i32_1 = arith.constant 0 : i32
    return %c0_i32, %c0_i32_0 : i32, i32
  }
  func.func @transform_10(%arg0: i32) -> (i32, i32) {
    %c0_i32 = arith.constant 0 : i32
    %c0_i32_0 = arith.constant 0 : i32
    %c0_i32_1 = arith.constant 0 : i32
    return %c0_i32, %c0_i32_0 : i32, i32
  }
  func.func @transform_11(%arg0: i32) -> (i32, i32) {
    %c0_i32 = arith.constant 0 : i32
    %c0_i32_0 = arith.constant 0 : i32
    %c0_i32_1 = arith.constant 0 : i32
    return %c0_i32, %c0_i32_0 : i32, i32
  }
  func.func @transform_12(%arg0: i32) -> (i32, i32) {
    %c0_i32 = arith.constant 0 : i32
    %c0_i32_0 = arith.constant 0 : i32
    %c0_i32_1 = arith.constant 0 : i32
    return %c0_i32, %c0_i32_0 : i32, i32
  }
  func.func @transform_13(%arg0: i32) -> (i32, i32) {
    %c0_i32 = arith.constant 0 : i32
    %c0_i32_0 = arith.constant 0 : i32
    %c0_i32_1 = arith.constant 0 : i32
    return %c0_i32, %c0_i32_0 : i32, i32
  }
  func.func @transform_14(%arg0: i32) -> (i32, i32) {
    %c0_i32 = arith.constant 0 : i32
    %c0_i32_0 = arith.constant 0 : i32
    %c0_i32_1 = arith.constant 0 : i32
    return %c0_i32, %c0_i32_0 : i32, i32
  }
  func.func @transform_15(%arg0: i32) -> (i32, i32) {
    %c0_i32 = arith.constant 0 : i32
    %c0_i32_0 = arith.constant 0 : i32
    %c0_i32_1 = arith.constant 0 : i32
    return %c0_i32, %c0_i32_0 : i32, i32
  }
  func.func @transform_16(%arg0: i32) -> (i32, i32) {
    %c0_i32 = arith.constant 0 : i32
    %c0_i32_0 = arith.constant 0 : i32
    %c0_i32_1 = arith.constant 0 : i32
    return %c0_i32, %c0_i32_0 : i32, i32
  }
  func.func @transform_17(%arg0: i32) -> (i32, i32) {
    %c0_i32 = arith.constant 0 : i32
    %c0_i32_0 = arith.constant 0 : i32
    return %arg0, %c0_i32 : i32, i32
  }
  func.func @transform_18(%arg0: i32) -> (i32, i32) {
    %c0_i32 = arith.constant 0 : i32
    %c0_i32_0 = arith.constant 0 : i32
    return %arg0, %c0_i32 : i32, i32
  }
}

</mosaic_0001>

<llo_original>
// kernel: autoencoder_forward.1
$region0: #{autoencoder_forward.1}
  #allocation0 [shape = 'u32[]', space=smem, size = 0x4, offset = 0x4, fixed_abs, tag = 'smem constant byte address 0x4 - core index']
  #allocation1 [shape = 'u32[72,128]{1,0:T(1,128)}', space=vmem, size = 0x9000, scoped, tag = 'internal scratch']
  %s0 = inlined_call_operand.vmem [shape: f32[32,784], index: 0, kind: input, shape index: {}]
  %s1 = inlined_call_operand.vmem [shape: bf16[784,128], index: 1, kind: input, shape index: {}]
  %s2 = inlined_call_operand.vmem [shape: bf16[128,64], index: 2, kind: input, shape index: {}]
  %s3 = inlined_call_operand.vmem [shape: bf16[64,12], index: 3, kind: input, shape index: {}]
  %s4 = inlined_call_operand.vmem [shape: bf16[12,3], index: 4, kind: input, shape index: {}]
  %s5 = inlined_call_operand.vmem [shape: f32[1,128], index: 5, kind: input, shape index: {}]
  %s6 = inlined_call_operand.vmem [shape: f32[1,64], index: 6, kind: input, shape index: {}]
  %s7 = inlined_call_operand.vmem [shape: f32[1,12], index: 7, kind: input, shape index: {}]
  %s8 = inlined_call_operand.vmem [shape: f32[1,3], index: 8, kind: input, shape index: {}]
  %s9 = inlined_call_operand.vmem [shape: bf16[3,12], index: 9, kind: input, shape index: {}]
  %s10 = inlined_call_operand.vmem [shape: bf16[12,64], index: 10, kind: input, shape index: {}]
  %s11 = inlined_call_operand.vmem [shape: bf16[64,128], index: 11, kind: input, shape index: {}]
  %s12 = inlined_call_operand.vmem [shape: bf16[128,784], index: 12, kind: input, shape index: {}]
  %s13 = inlined_call_operand.vmem [shape: f32[1,12], index: 13, kind: input, shape index: {}]
  %s14 = inlined_call_operand.vmem [shape: f32[1,64], index: 14, kind: input, shape index: {}]
  %s15 = inlined_call_operand.vmem [shape: f32[1,128], index: 15, kind: input, shape index: {}]
  %s16 = inlined_call_operand.vmem [shape: f32[1,784], index: 16, kind: input, shape index: {}]
  %s17 = inlined_call_operand.vmem [shape: f32[32,3], index: 17, kind: output, shape index: {0}]
  %s18 = inlined_call_operand.hbm [shape: bf16[32,784], index: 18, kind: output, shape index: {1}]
  %19 = xla_tuple %s17, %s18
  %s20 = sld [smem:[#allocation0]]
  $region109: #{autoencoder_forward.1} parent=0
    _
  %s22 = ssub.s32 1, %s20
  %s23 = scalar_select 0, %s22, %s20
  $region1: #{autoencoder_forward.1} parent=0
    #allocation2 [shape = 'u8[57344]{0}', space=vmem, size = 0xe000, scoped, tag = 'output window, operand 1']
    #allocation3 [shape = 's32[2]{0}', space=sflag, size = 0x8, scoped, tag = 'scoped memory for autoencoder_forward.1']
    %24 = vsyncpa [#allocation3], 0
    %s25 = scalar_lea.sflag [#allocation3], 1
    %26 = vsyncpa %s25, 0
    loop: start=0, step=1, limit=4
    $region2: #{autoencoder_forward.1} parent=1 // loop_pre_header
      _
    $region3: #{autoencoder_forward.1} parent=1 // loop_header
      %s28 = sphi 0, %s32
      %p29 = scmp.ge.s32.totalorder %s28, 4
      %s38 = sphi 0, %s40
      %s41 = sphi 0, %s38
      %s42 = sphi 0, %s41
      %s58 = sphi 0, %s42
      %s62 = sphi 0, %s62
      %s64 = sphi 0, %s62
      %s65 = sphi 0, %s64
      %s79 = sphi 0, %s65
      %s83 = sphi 0, %s83
      %s85 = sphi 0, %s83
      %s86 = sphi 0, %s85
      %s100 = sphi 0, %s86
      %s104 = sphi 0, %s104
      %s106 = sphi 0, %s104
      %s107 = sphi 0, %s106
      %s121 = sphi 0, %s107
      %s125 = sphi 0, %s125
      %s127 = sphi 0, %s125
      %s128 = sphi 0, %s127
      %s142 = sphi 0, %s128
      %s146 = sphi 0, %s146
      %s148 = sphi 0, %s146
      %s149 = sphi 0, %s148
      %s163 = sphi 0, %s149
      %s167 = sphi 0, %s167
      %s169 = sphi 0, %s167
      %s170 = sphi 0, %s169
      %s184 = sphi 0, %s170
      %s188 = sphi 0, %s188
      %s190 = sphi 0, %s188
      %s191 = sphi 0, %s190
      %s205 = sphi 0, %s191
      %s209 = sphi 0, %s209
      %s211 = sphi 0, %s209
      %s212 = sphi 0, %s211
      %s226 = sphi 0, %s212
      %s230 = sphi 0, %s230
      %s232 = sphi 0, %s230
      %s233 = sphi 0, %s232
      %s247 = sphi 0, %s233
      %s251 = sphi 0, %s251
      %s253 = sphi 0, %s251
      %s254 = sphi 0, %s253
      %s268 = sphi 0, %s254
      %s272 = sphi 0, %s272
      %s274 = sphi 0, %s272
      %s275 = sphi 0, %s274
      %s289 = sphi 0, %s275
      %s293 = sphi 0, %s293
      %s295 = sphi 0, %s293
      %s296 = sphi 0, %s295
      %s310 = sphi 0, %s296
      %s314 = sphi 0, %s314
      %s316 = sphi 0, %s314
      %s317 = sphi 0, %s316
      %s331 = sphi 0, %s317
      %s335 = sphi 0, %s335
      %s337 = sphi 0, %s335
      %s338 = sphi 0, %s337
      %s352 = sphi 0, %s338
      %s356 = sphi 0, %s356
      %s358 = sphi 0, %s356
      %s359 = sphi 0, %s358
      %s373 = sphi 0, %s359
      %s377 = sphi 0, %s377
      %s379 = sphi 0, %s377
      %s380 = sphi 0, %s379
      %s394 = sphi 0, %s380
      %s400 = sphi 0, %s402
      %s403 = sphi 0, %s400
      %s404 = sphi 0, %s403
      %s420 = sphi 0, %s404
      %s426 = sphi 0, %s428
      %s429 = sphi 0, %s426
      %s430 = sphi 0, %s429
      %s446 = sphi 0, %s430
    $region4: #{autoencoder_forward.1} parent=1 // loop_header_branch
      %31 = sbr.rel (%p29) target = $region8
    $region5: #{autoencoder_forward.1} parent=1 // loop_body
      %s33 = ssub.s32 %s28, 1
      %s34 = ssub.s32 %s28, 2
      %s35 = sadd.s32 %s28, 1
      %s36 = ssub.s32 %s28, %s35
      %p37 = scmp.eq.s32.totalorder %s36, 0
      %s39 = sadd.s32 %s38, 1
      %s40 = scalar_select %p37, %s38, %s39
      %p43 = pneg %p37
      %p44 = scmp.eq.s32.totalorder %s28, 1
      %p45 = por %p43, %p44
      %p46 = scmp.ne.s32.totalorder %s38, %s41
      %p47 = scmp.eq.s32.totalorder %s28, 0
      %p48 = por %p46, %p47
      %p49 = scmp.ne.s32.totalorder %s38, %s41
      %p50 = scmp.eq.s32.totalorder %s33, 1
      %p51 = por %p49, %p50
      %p52 = scmp.ne.s32.totalorder %s41, %s42
      %p53 = scmp.eq.s32.totalorder %s33, 0
      %p54 = por %p52, %p53
      %p55 = scmp.ne.s32.totalorder %s41, %s42
      %p56 = scmp.eq.s32.totalorder %s34, 1
      %p57 = por %p55, %p56
      %p59 = scmp.ne.s32.totalorder %s42, %s58
      %p60 = scmp.eq.s32.totalorder %s34, 0
      %p61 = por %p59, %p60
      %s63 = sadd.s32 %s62, 1
      %p66 = scmp.eq.s32.totalorder %s28, 1
      %p67 = scmp.ne.s32.totalorder %s62, %s64
      %p68 = scmp.eq.s32.totalorder %s28, 0
      %p69 = por %p67, %p68
      %p70 = scmp.ne.s32.totalorder %s62, %s64
      %p71 = scmp.eq.s32.totalorder %s33, 1
      %p72 = por %p70, %p71
      %p73 = scmp.ne.s32.totalorder %s64, %s65
      %p74 = scmp.eq.s32.totalorder %s33, 0
      %p75 = por %p73, %p74
      %p76 = scmp.ne.s32.totalorder %s64, %s65
      %p77 = scmp.eq.s32.totalorder %s34, 1
      %p78 = por %p76, %p77
      %p80 = scmp.ne.s32.totalorder %s65, %s79
      %p81 = scmp.eq.s32.totalorder %s34, 0
      %p82 = por %p80, %p81
      %s84 = sadd.s32 %s83, 1
      %p87 = scmp.eq.s32.totalorder %s28, 1
      %p88 = scmp.ne.s32.totalorder %s83, %s85
      %p89 = scmp.eq.s32.totalorder %s28, 0
      %p90 = por %p88, %p89
      %p91 = scmp.ne.s32.totalorder %s83, %s85
      %p92 = scmp.eq.s32.totalorder %s33, 1
      %p93 = por %p91, %p92
      %p94 = scmp.ne.s32.totalorder %s85, %s86
      %p95 = scmp.eq.s32.totalorder %s33, 0
      %p96 = por %p94, %p95
      %p97 = scmp.ne.s32.totalorder %s85, %s86
      %p98 = scmp.eq.s32.totalorder %s34, 1
      %p99 = por %p97, %p98
      %p101 = scmp.ne.s32.totalorder %s86, %s100
      %p102 = scmp.eq.s32.totalorder %s34, 0
      %p103 = por %p101, %p102
      %s105 = sadd.s32 %s104, 1
      %p108 = scmp.eq.s32.totalorder %s28, 1
      %p109 = scmp.ne.s32.totalorder %s104, %s106
      %p110 = scmp.eq.s32.totalorder %s28, 0
      %p111 = por %p109, %p110
      %p112 = scmp.ne.s32.totalorder %s104, %s106
      %p113 = scmp.eq.s32.totalorder %s33, 1
      %p114 = por %p112, %p113
      %p115 = scmp.ne.s32.totalorder %s106, %s107
      %p116 = scmp.eq.s32.totalorder %s33, 0
      %p117 = por %p115, %p116
      %p118 = scmp.ne.s32.totalorder %s106, %s107
      %p119 = scmp.eq.s32.totalorder %s34, 1
      %p120 = por %p118, %p119
      %p122 = scmp.ne.s32.totalorder %s107, %s121
      %p123 = scmp.eq.s32.totalorder %s34, 0
      %p124 = por %p122, %p123
      %s126 = sadd.s32 %s125, 1
      %p129 = scmp.eq.s32.totalorder %s28, 1
      %p130 = scmp.ne.s32.totalorder %s125, %s127
      %p131 = scmp.eq.s32.totalorder %s28, 0
      %p132 = por %p130, %p131
      %p133 = scmp.ne.s32.totalorder %s125, %s127
      %p134 = scmp.eq.s32.totalorder %s33, 1
      %p135 = por %p133, %p134
      %p136 = scmp.ne.s32.totalorder %s127, %s128
      %p137 = scmp.eq.s32.totalorder %s33, 0
      %p138 = por %p136, %p137
      %p139 = scmp.ne.s32.totalorder %s127, %s128
      %p140 = scmp.eq.s32.totalorder %s34, 1
      %p141 = por %p139, %p140
      %p143 = scmp.ne.s32.totalorder %s128, %s142
      %p144 = scmp.eq.s32.totalorder %s34, 0
      %p145 = por %p143, %p144
      %s147 = sadd.s32 %s146, 1
      %p150 = scmp.eq.s32.totalorder %s28, 1
      %p151 = scmp.ne.s32.totalorder %s146, %s148
      %p152 = scmp.eq.s32.totalorder %s28, 0
      %p153 = por %p151, %p152
      %p154 = scmp.ne.s32.totalorder %s146, %s148
      %p155 = scmp.eq.s32.totalorder %s33, 1
      %p156 = por %p154, %p155
      %p157 = scmp.ne.s32.totalorder %s148, %s149
      %p158 = scmp.eq.s32.totalorder %s33, 0
      %p159 = por %p157, %p158
      %p160 = scmp.ne.s32.totalorder %s148, %s149
      %p161 = scmp.eq.s32.totalorder %s34, 1
      %p162 = por %p160, %p161
      %p164 = scmp.ne.s32.totalorder %s149, %s163
      %p165 = scmp.eq.s32.totalorder %s34, 0
      %p166 = por %p164, %p165
      %s168 = sadd.s32 %s167, 1
      %p171 = scmp.eq.s32.totalorder %s28, 1
      %p172 = scmp.ne.s32.totalorder %s167, %s169
      %p173 = scmp.eq.s32.totalorder %s28, 0
      %p174 = por %p172, %p173
      %p175 = scmp.ne.s32.totalorder %s167, %s169
      %p176 = scmp.eq.s32.totalorder %s33, 1
      %p177 = por %p175, %p176
      %p178 = scmp.ne.s32.totalorder %s169, %s170
      %p179 = scmp.eq.s32.totalorder %s33, 0
      %p180 = por %p178, %p179
      %p181 = scmp.ne.s32.totalorder %s169, %s170
      %p182 = scmp.eq.s32.totalorder %s34, 1
      %p183 = por %p181, %p182
      %p185 = scmp.ne.s32.totalorder %s170, %s184
      %p186 = scmp.eq.s32.totalorder %s34, 0
      %p187 = por %p185, %p186
      %s189 = sadd.s32 %s188, 1
      %p192 = scmp.eq.s32.totalorder %s28, 1
      %p193 = scmp.ne.s32.totalorder %s188, %s190
      %p194 = scmp.eq.s32.totalorder %s28, 0
      %p195 = por %p193, %p194
      %p196 = scmp.ne.s32.totalorder %s188, %s190
      %p197 = scmp.eq.s32.totalorder %s33, 1
      %p198 = por %p196, %p197
      %p199 = scmp.ne.s32.totalorder %s190, %s191
      %p200 = scmp.eq.s32.totalorder %s33, 0
      %p201 = por %p199, %p200
      %p202 = scmp.ne.s32.totalorder %s190, %s191
      %p203 = scmp.eq.s32.totalorder %s34, 1
      %p204 = por %p202, %p203
      %p206 = scmp.ne.s32.totalorder %s191, %s205
      %p207 = scmp.eq.s32.totalorder %s34, 0
      %p208 = por %p206, %p207
      %s210 = sadd.s32 %s209, 1
      %p213 = scmp.eq.s32.totalorder %s28, 1
      %p214 = scmp.ne.s32.totalorder %s209, %s211
      %p215 = scmp.eq.s32.totalorder %s28, 0
      %p216 = por %p214, %p215
      %p217 = scmp.ne.s32.totalorder %s209, %s211
      %p218 = scmp.eq.s32.totalorder %s33, 1
      %p219 = por %p217, %p218
      %p220 = scmp.ne.s32.totalorder %s211, %s212
      %p221 = scmp.eq.s32.totalorder %s33, 0
      %p222 = por %p220, %p221
      %p223 = scmp.ne.s32.totalorder %s211, %s212
      %p224 = scmp.eq.s32.totalorder %s34, 1
      %p225 = por %p223, %p224
      %p227 = scmp.ne.s32.totalorder %s212, %s226
      %p228 = scmp.eq.s32.totalorder %s34, 0
      %p229 = por %p227, %p228
      %s231 = sadd.s32 %s230, 1
      %p234 = scmp.eq.s32.totalorder %s28, 1
      %p235 = scmp.ne.s32.totalorder %s230, %s232
      %p236 = scmp.eq.s32.totalorder %s28, 0
      %p237 = por %p235, %p236
      %p238 = scmp.ne.s32.totalorder %s230, %s232
      %p239 = scmp.eq.s32.totalorder %s33, 1
      %p240 = por %p238, %p239
      %p241 = scmp.ne.s32.totalorder %s232, %s233
      %p242 = scmp.eq.s32.totalorder %s33, 0
      %p243 = por %p241, %p242
      %p244 = scmp.ne.s32.totalorder %s232, %s233
      %p245 = scmp.eq.s32.totalorder %s34, 1
      %p246 = por %p244, %p245
      %p248 = scmp.ne.s32.totalorder %s233, %s247
      %p249 = scmp.eq.s32.totalorder %s34, 0
      %p250 = por %p248, %p249
      %s252 = sadd.s32 %s251, 1
      %p255 = scmp.eq.s32.totalorder %s28, 1
      %p256 = scmp.ne.s32.totalorder %s251, %s253
      %p257 = scmp.eq.s32.totalorder %s28, 0
      %p258 = por %p256, %p257
      %p259 = scmp.ne.s32.totalorder %s251, %s253
      %p260 = scmp.eq.s32.totalorder %s33, 1
      %p261 = por %p259, %p260
      %p262 = scmp.ne.s32.totalorder %s253, %s254
      %p263 = scmp.eq.s32.totalorder %s33, 0
      %p264 = por %p262, %p263
      %p265 = scmp.ne.s32.totalorder %s253, %s254
      %p266 = scmp.eq.s32.totalorder %s34, 1
      %p267 = por %p265, %p266
      %p269 = scmp.ne.s32.totalorder %s254, %s268
      %p270 = scmp.eq.s32.totalorder %s34, 0
      %p271 = por %p269, %p270
      %s273 = sadd.s32 %s272, 1
      %p276 = scmp.eq.s32.totalorder %s28, 1
      %p277 = scmp.ne.s32.totalorder %s272, %s274
      %p278 = scmp.eq.s32.totalorder %s28, 0
      %p279 = por %p277, %p278
      %p280 = scmp.ne.s32.totalorder %s272, %s274
      %p281 = scmp.eq.s32.totalorder %s33, 1
      %p282 = por %p280, %p281
      %p283 = scmp.ne.s32.totalorder %s274, %s275
      %p284 = scmp.eq.s32.totalorder %s33, 0
      %p285 = por %p283, %p284
      %p286 = scmp.ne.s32.totalorder %s274, %s275
      %p287 = scmp.eq.s32.totalorder %s34, 1
      %p288 = por %p286, %p287
      %p290 = scmp.ne.s32.totalorder %s275, %s289
      %p291 = scmp.eq.s32.totalorder %s34, 0
      %p292 = por %p290, %p291
      %s294 = sadd.s32 %s293, 1
      %p297 = scmp.eq.s32.totalorder %s28, 1
      %p298 = scmp.ne.s32.totalorder %s293, %s295
      %p299 = scmp.eq.s32.totalorder %s28, 0
      %p300 = por %p298, %p299
      %p301 = scmp.ne.s32.totalorder %s293, %s295
      %p302 = scmp.eq.s32.totalorder %s33, 1
      %p303 = por %p301, %p302
      %p304 = scmp.ne.s32.totalorder %s295, %s296
      %p305 = scmp.eq.s32.totalorder %s33, 0
      %p306 = por %p304, %p305
      %p307 = scmp.ne.s32.totalorder %s295, %s296
      %p308 = scmp.eq.s32.totalorder %s34, 1
      %p309 = por %p307, %p308
      %p311 = scmp.ne.s32.totalorder %s296, %s310
      %p312 = scmp.eq.s32.totalorder %s34, 0
      %p313 = por %p311, %p312
      %s315 = sadd.s32 %s314, 1
      %p318 = scmp.eq.s32.totalorder %s28, 1
      %p319 = scmp.ne.s32.totalorder %s314, %s316
      %p320 = scmp.eq.s32.totalorder %s28, 0
      %p321 = por %p319, %p320
      %p322 = scmp.ne.s32.totalorder %s314, %s316
      %p323 = scmp.eq.s32.totalorder %s33, 1
      %p324 = por %p322, %p323
      %p325 = scmp.ne.s32.totalorder %s316, %s317
      %p326 = scmp.eq.s32.totalorder %s33, 0
      %p327 = por %p325, %p326
      %p328 = scmp.ne.s32.totalorder %s316, %s317
      %p329 = scmp.eq.s32.totalorder %s34, 1
      %p330 = por %p328, %p329
      %p332 = scmp.ne.s32.totalorder %s317, %s331
      %p333 = scmp.eq.s32.totalorder %s34, 0
      %p334 = por %p332, %p333
      %s336 = sadd.s32 %s335, 1
      %p339 = scmp.eq.s32.totalorder %s28, 1
      %p340 = scmp.ne.s32.totalorder %s335, %s337
      %p341 = scmp.eq.s32.totalorder %s28, 0
      %p342 = por %p340, %p341
      %p343 = scmp.ne.s32.totalorder %s335, %s337
      %p344 = scmp.eq.s32.totalorder %s33, 1
      %p345 = por %p343, %p344
      %p346 = scmp.ne.s32.totalorder %s337, %s338
      %p347 = scmp.eq.s32.totalorder %s33, 0
      %p348 = por %p346, %p347
      %p349 = scmp.ne.s32.totalorder %s337, %s338
      %p350 = scmp.eq.s32.totalorder %s34, 1
      %p351 = por %p349, %p350
      %p353 = scmp.ne.s32.totalorder %s338, %s352
      %p354 = scmp.eq.s32.totalorder %s34, 0
      %p355 = por %p353, %p354
      %s357 = sadd.s32 %s356, 1
      %p360 = scmp.eq.s32.totalorder %s28, 1
      %p361 = scmp.ne.s32.totalorder %s356, %s358
      %p362 = scmp.eq.s32.totalorder %s28, 0
      %p363 = por %p361, %p362
      %p364 = scmp.ne.s32.totalorder %s356, %s358
      %p365 = scmp.eq.s32.totalorder %s33, 1
      %p366 = por %p364, %p365
      %p367 = scmp.ne.s32.totalorder %s358, %s359
      %p368 = scmp.eq.s32.totalorder %s33, 0
      %p369 = por %p367, %p368
      %p370 = scmp.ne.s32.totalorder %s358, %s359
      %p371 = scmp.eq.s32.totalorder %s34, 1
      %p372 = por %p370, %p371
      %p374 = scmp.ne.s32.totalorder %s359, %s373
      %p375 = scmp.eq.s32.totalorder %s34, 0
      %p376 = por %p374, %p375
      %s378 = sadd.s32 %s377, 1
      %p381 = scmp.eq.s32.totalorder %s28, 1
      %p382 = scmp.ne.s32.totalorder %s377, %s379
      %p383 = scmp.eq.s32.totalorder %s28, 0
      %p384 = por %p382, %p383
      %p385 = scmp.ne.s32.totalorder %s377, %s379
      %p386 = scmp.eq.s32.totalorder %s33, 1
      %p387 = por %p385, %p386
      %p388 = scmp.ne.s32.totalorder %s379, %s380
      %p389 = scmp.eq.s32.totalorder %s33, 0
      %p390 = por %p388, %p389
      %p391 = scmp.ne.s32.totalorder %s379, %s380
      %p392 = scmp.eq.s32.totalorder %s34, 1
      %p393 = por %p391, %p392
      %p395 = scmp.ne.s32.totalorder %s380, %s394
      %p396 = scmp.eq.s32.totalorder %s34, 0
      %p397 = por %p395, %p396
      %s398 = ssub.s32 %s28, %s35
      %p399 = scmp.eq.s32.totalorder %s398, 0
      %s401 = sadd.s32 %s400, 1
      %s402 = scalar_select %p399, %s400, %s401
      %p405 = pneg %p399
      %p406 = scmp.eq.s32.totalorder %s28, 1
      %p407 = por %p405, %p406
      %p408 = scmp.ne.s32.totalorder %s400, %s403
      %p409 = scmp.eq.s32.totalorder %s28, 0
      %p410 = por %p408, %p409
      %p411 = scmp.ne.s32.totalorder %s400, %s403
      %p412 = scmp.eq.s32.totalorder %s33, 1
      %p413 = por %p411, %p412
      %p414 = scmp.ne.s32.totalorder %s403, %s404
      %p415 = scmp.eq.s32.totalorder %s33, 0
      %p416 = por %p414, %p415
      %p417 = scmp.ne.s32.totalorder %s403, %s404
      %p418 = scmp.eq.s32.totalorder %s34, 1
      %p419 = por %p417, %p418
      %p421 = scmp.ne.s32.totalorder %s404, %s420
      %p422 = scmp.eq.s32.totalorder %s34, 0
      %p423 = por %p421, %p422
      %s424 = ssub.s32 %s28, %s35
      %p425 = scmp.eq.s32.totalorder %s424, 0
      %s427 = sadd.s32 %s426, 1
      %s428 = scalar_select %p425, %s426, %s427
      %p431 = pneg %p425
      %p432 = scmp.eq.s32.totalorder %s28, 1
      %p433 = por %p431, %p432
      %p434 = scmp.ne.s32.totalorder %s426, %s429
      %p435 = scmp.eq.s32.totalorder %s28, 0
      %p436 = por %p434, %p435
      %p437 = scmp.ne.s32.totalorder %s426, %s429
      %p438 = scmp.eq.s32.totalorder %s33, 1
      %p439 = por %p437, %p438
      %p440 = scmp.ne.s32.totalorder %s429, %s430
      %p441 = scmp.eq.s32.totalorder %s33, 0
      %p442 = por %p440, %p441
      %p443 = scmp.ne.s32.totalorder %s429, %s430
      %p444 = scmp.eq.s32.totalorder %s34, 1
      %p445 = por %p443, %p444
      %p447 = scmp.ne.s32.totalorder %s430, %s446
      %p448 = scmp.eq.s32.totalorder %s34, 0
      %p449 = por %p447, %p448
      %p450 = scmp.le.s32.totalorder 1, %s28
      %p451 = scmp.lt.s32.totalorder %s28, 3
      %p452 = pnand %p450, %p451
      %p453 = pneg %p452
      // Predicated region
      $region9: #{autoencoder_forward.1} parent=5 // pred_check
        _
      $region10: #{autoencoder_forward.1} parent=5 // pred_check_branch
        %455 = sbr.rel (%p452) target = $region12
      $region11: #{autoencoder_forward.1} parent=5 // pred_region
        %s456 = ssub.s32 %s28, 1
        // Predicated region
        $region13: #{autoencoder_forward.1} parent=11 // pred_check
          %p457 = pneg %p75
        $region14: #{autoencoder_forward.1} parent=11 // pred_check_branch
          %459 = sbr.rel (%p457) target = $region16
        $region15: #{autoencoder_forward.1} parent=11 // pred_region
          _
        $region16: #{autoencoder_forward.1} parent=11 // pred_fallthru
          _
        // Predicated region
        $region17: #{autoencoder_forward.1} parent=11 // pred_check
          %p460 = pneg %p96
        $region18: #{autoencoder_forward.1} parent=11 // pred_check_branch
          %462 = sbr.rel (%p460) target = $region20
        $region19: #{autoencoder_forward.1} parent=11 // pred_region
          _
        $region20: #{autoencoder_forward.1} parent=11 // pred_fallthru
          _
        // Predicated region
        $region21: #{autoencoder_forward.1} parent=11 // pred_check
          %p463 = pneg %p117
        $region22: #{autoencoder_forward.1} parent=11 // pred_check_branch
          %465 = sbr.rel (%p463) target = $region24
        $region23: #{autoencoder_forward.1} parent=11 // pred_region
          _
        $region24: #{autoencoder_forward.1} parent=11 // pred_fallthru
          _
        // Predicated region
        $region25: #{autoencoder_forward.1} parent=11 // pred_check
          %p466 = pneg %p138
        $region26: #{autoencoder_forward.1} parent=11 // pred_check_branch
          %468 = sbr.rel (%p466) target = $region28
        $region27: #{autoencoder_forward.1} parent=11 // pred_region
          _
        $region28: #{autoencoder_forward.1} parent=11 // pred_fallthru
          _
        // Predicated region
        $region29: #{autoencoder_forward.1} parent=11 // pred_check
          %p469 = pneg %p159
        $region30: #{autoencoder_forward.1} parent=11 // pred_check_branch
          %471 = sbr.rel (%p469) target = $region32
        $region31: #{autoencoder_forward.1} parent=11 // pred_region
          _
        $region32: #{autoencoder_forward.1} parent=11 // pred_fallthru
          _
        // Predicated region
        $region33: #{autoencoder_forward.1} parent=11 // pred_check
          %p472 = pneg %p180
        $region34: #{autoencoder_forward.1} parent=11 // pred_check_branch
          %474 = sbr.rel (%p472) target = $region36
        $region35: #{autoencoder_forward.1} parent=11 // pred_region
          _
        $region36: #{autoencoder_forward.1} parent=11 // pred_fallthru
          _
        // Predicated region
        $region37: #{autoencoder_forward.1} parent=11 // pred_check
          %p475 = pneg %p201
        $region38: #{autoencoder_forward.1} parent=11 // pred_check_branch
          %477 = sbr.rel (%p475) target = $region40
        $region39: #{autoencoder_forward.1} parent=11 // pred_region
          _
        $region40: #{autoencoder_forward.1} parent=11 // pred_fallthru
          _
        // Predicated region
        $region41: #{autoencoder_forward.1} parent=11 // pred_check
          %p478 = pneg %p222
        $region42: #{autoencoder_forward.1} parent=11 // pred_check_branch
          %480 = sbr.rel (%p478) target = $region44
        $region43: #{autoencoder_forward.1} parent=11 // pred_region
          _
        $region44: #{autoencoder_forward.1} parent=11 // pred_fallthru
          _
        // Predicated region
        $region45: #{autoencoder_forward.1} parent=11 // pred_check
          %p481 = pneg %p243
        $region46: #{autoencoder_forward.1} parent=11 // pred_check_branch
          %483 = sbr.rel (%p481) target = $region48
        $region47: #{autoencoder_forward.1} parent=11 // pred_region
          _
        $region48: #{autoencoder_forward.1} parent=11 // pred_fallthru
          _
        // Predicated region
        $region49: #{autoencoder_forward.1} parent=11 // pred_check
          %p484 = pneg %p264
        $region50: #{autoencoder_forward.1} parent=11 // pred_check_branch
          %486 = sbr.rel (%p484) target = $region52
        $region51: #{autoencoder_forward.1} parent=11 // pred_region
          _
        $region52: #{autoencoder_forward.1} parent=11 // pred_fallthru
          _
        // Predicated region
        $region53: #{autoencoder_forward.1} parent=11 // pred_check
          %p487 = pneg %p285
        $region54: #{autoencoder_forward.1} parent=11 // pred_check_branch
          %489 = sbr.rel (%p487) target = $region56
        $region55: #{autoencoder_forward.1} parent=11 // pred_region
          _
        $region56: #{autoencoder_forward.1} parent=11 // pred_fallthru
          _
        // Predicated region
        $region57: #{autoencoder_forward.1} parent=11 // pred_check
          %p490 = pneg %p306
        $region58: #{autoencoder_forward.1} parent=11 // pred_check_branch
          %492 = sbr.rel (%p490) target = $region60
        $region59: #{autoencoder_forward.1} parent=11 // pred_region
          _
        $region60: #{autoencoder_forward.1} parent=11 // pred_fallthru
          _
        // Predicated region
        $region61: #{autoencoder_forward.1} parent=11 // pred_check
          %p493 = pneg %p327
        $region62: #{autoencoder_forward.1} parent=11 // pred_check_branch
          %495 = sbr.rel (%p493) target = $region64
        $region63: #{autoencoder_forward.1} parent=11 // pred_region
          _
        $region64: #{autoencoder_forward.1} parent=11 // pred_fallthru
          _
        // Predicated region
        $region65: #{autoencoder_forward.1} parent=11 // pred_check
          %p496 = pneg %p348
        $region66: #{autoencoder_forward.1} parent=11 // pred_check_branch
          %498 = sbr.rel (%p496) target = $region68
        $region67: #{autoencoder_forward.1} parent=11 // pred_region
          _
        $region68: #{autoencoder_forward.1} parent=11 // pred_fallthru
          _
        // Predicated region
        $region69: #{autoencoder_forward.1} parent=11 // pred_check
          %p499 = pneg %p369
        $region70: #{autoencoder_forward.1} parent=11 // pred_check_branch
          %501 = sbr.rel (%p499) target = $region72
        $region71: #{autoencoder_forward.1} parent=11 // pred_region
          _
        $region72: #{autoencoder_forward.1} parent=11 // pred_fallthru
          _
        // Predicated region
        $region73: #{autoencoder_forward.1} parent=11 // pred_check
          %p502 = pneg %p390
        $region74: #{autoencoder_forward.1} parent=11 // pred_check_branch
          %504 = sbr.rel (%p502) target = $region76
        $region75: #{autoencoder_forward.1} parent=11 // pred_region
          _
        $region76: #{autoencoder_forward.1} parent=11 // pred_fallthru
          _
      $region12: #{autoencoder_forward.1} parent=5 // pred_fallthru
        _
      %p505 = scmp.lt.s32.totalorder %s28, 2
      // Predicated region
      $region77: #{autoencoder_forward.1} parent=5 // pred_check
        %p506 = pneg %p505
      $region78: #{autoencoder_forward.1} parent=5 // pred_check_branch
        %508 = sbr.rel (%p506) target = $region80
      $region79: #{autoencoder_forward.1} parent=5 // pred_region
        // Predicated region
        $region81: #{autoencoder_forward.1} parent=79 // pred_check
          %p509 = pneg %p48
        $region82: #{autoencoder_forward.1} parent=79 // pred_check_branch
          %511 = sbr.rel (%p509) target = $region84
        $region83: #{autoencoder_forward.1} parent=79 // pred_region
          %s512 = smul.u32 2, %s28
          %p513 = scmp.lt.s32.totalorder %s512, 3
          %s514 = scalar_select %p513, %s512, 3
          %s515 = smul.addr %s514, 7
          %s516 = smul.addr %s515, 8
          %s517 = scalar_lea.vmem %s0, %s516
          %s518 = smul.u32 2, %s28
        $region84: #{autoencoder_forward.1} parent=79 // pred_fallthru
          _
      $region80: #{autoencoder_forward.1} parent=5 // pred_fallthru
        _
      %p519 = scmp.le.s32.totalorder 1, %s28
      %p520 = scmp.lt.s32.totalorder %s28, 3
      %p521 = pnand %p519, %p520
      %p522 = pneg %p521
      // Predicated region
      $region85: #{autoencoder_forward.1} parent=5 // pred_check
        _
      $region86: #{autoencoder_forward.1} parent=5 // pred_check_branch
        %524 = sbr.rel (%p521) target = $region88
      $region87: #{autoencoder_forward.1} parent=5 // pred_region
        %s525 = ssub.s32 %s28, 1
        %s526 = smul.u32 2, %s33
        %p527 = scmp.lt.s32.totalorder %s526, 3
        %s528 = scalar_select %p527, %s526, 3
        %s529 = smul.addr %s528, 7
        %s530 = smul.addr %s529, 8
        %s531 = scalar_lea.vmem %s0, %s530
        %p532 = pneg %p54
        %p533 = pneg %p51
        %p534 = pneg %p75
        %p535 = pneg %p72
        %p536 = pneg %p96
        %p537 = pneg %p93
        %p538 = pneg %p117
        %p539 = pneg %p114
        %p540 = pneg %p138
        %p541 = pneg %p135
        %p542 = pneg %p159
        %p543 = pneg %p156
        %p544 = pneg %p180
        %p545 = pneg %p177
        %p546 = pneg %p201
        %p547 = pneg %p198
        %p548 = pneg %p222
        %p549 = pneg %p219
        %p550 = pneg %p243
        %p551 = pneg %p240
        %p552 = pneg %p264
        %p553 = pneg %p261
        %p554 = pneg %p285
        %p555 = pneg %p282
        %p556 = pneg %p306
        %p557 = pneg %p303
        %p558 = pneg %p327
        %p559 = pneg %p324
        %p560 = pneg %p348
        %p561 = pneg %p345
        %p562 = pneg %p369
        %p563 = pneg %p366
        %p564 = pneg %p390
        %p565 = pneg %p387
        %p566 = pneg %p416
        %p567 = pneg %p413
        %s568 = smul.u32 2, %s33
        %p569 = scmp.lt.s32.totalorder %s568, 3
        %s570 = scalar_select %p569, %s568, 3
        %s571 = smul.addr %s570, 8
        %s572 = scalar_lea.vmem %s17, %s571
        %p573 = pneg %p442
        %p574 = pneg %p439
        %s575 = sand.u32 %s429, 1
        %s576 = scalar_lea.sflag [#allocation3], %s575
        %s577 = sand.u32 %s429, 1
        %s578 = smul.addr %s577, 56
        %s579 = scalar_lea.vmem [#allocation2], %s578
        %s580 = smul.u32 2, %s33
        %p581 = scmp.lt.s32.totalorder %s580, 3
        %s582 = scalar_select %p581, %s580, 3
        %s583 = smul.addr %s582, 7
        %s584 = smul.addr %s583, 8
        %s585 = scalar_lea.vmem %s0, %s584
        %s586 = smul.u32 2, %s33
        %s587 = smul.u32 2, %s33
        %p588 = scmp.lt.s32.totalorder %s587, 3
        %s589 = scalar_select %p588, %s587, 3
        %s590 = smul.addr %s589, 8
        %s591 = scalar_lea.vmem %s17, %s590
        %s592 = smul.u32 2, %s33
        %s593 = smul.u32 2, %s33
        %v595 = vld [vmem:[%s585] sm:$0xff]
        %v596 = vld [vmem:[%s585 + $0x8] sm:$0xff]
        %v597 = vld [vmem:[%s585 + $0x10] sm:$0xff]
        %v598 = vld [vmem:[%s585 + $0x18] sm:$0xff]
        %v599 = vld [vmem:[%s585 + $0x20] sm:$0xff]
        %v600 = vld [vmem:[%s585 + $0x28] sm:$0xff]
        %v601 = vld [vmem:[%s585 + $0x30] sm:$0xff]
        %v602 = vld [vmem:[%s585 + $0x38] sm:$0xff]
        %v603 = vld [vmem:[%s585 + $0x40] sm:$0xff]
        %v604 = vld [vmem:[%s585 + $0x48] sm:$0xff]
        %v605 = vld [vmem:[%s585 + $0x50] sm:$0xff]
        %v606 = vld [vmem:[%s585 + $0x58] sm:$0xff]
        %v607 = vld [vmem:[%s585 + $0x60] sm:$0xff]
        %v608 = vld [vmem:[%s585 + $0x68] sm:$0xff]
        %v609 = vpack.c.bf16 %v602, %v595
        %v610 = vpack.c.bf16 %v603, %v596
        %v611 = vpack.c.bf16 %v604, %v597
        %v612 = vpack.c.bf16 %v605, %v598
        %v613 = vpack.c.bf16 %v606, %v599
        %v614 = vpack.c.bf16 %v607, %v600
        %v615 = vpack.c.bf16 %v608, %v601
        %v616 = vld [vmem:[%s1] sm:$0xf]
        %v617 = vld [vmem:[%s1 + $0x4] sm:$0xf]
        %v618 = vld [vmem:[%s1 + $0x8] sm:$0xf]
        %v619 = vld [vmem:[%s1 + $0xc] sm:$0xf]
        %v620 = vld [vmem:[%s1 + $0x10] sm:$0xf]
        %v621 = vld [vmem:[%s1 + $0x14] sm:$0xf]
        %v622 = vld [vmem:[%s1 + $0x18] sm:$0xf]
        %v623 = vld [vmem:[%s1 + $0x1c] sm:$0xf]
        %v624 = vld [vmem:[%s1 + $0x20] sm:$0xf]
        %v625 = vld [vmem:[%s1 + $0x24] sm:$0xf]
        %v626 = vld [vmem:[%s1 + $0x28] sm:$0xf]
        %v627 = vld [vmem:[%s1 + $0x2c] sm:$0xf]
        %v628 = vld [vmem:[%s1 + $0x30] sm:$0xf]
        %v629 = vld [vmem:[%s1 + $0x34] sm:$0xf]
        %v630 = vld [vmem:[%s1 + $0x38] sm:$0xf]
        %v631 = vld [vmem:[%s1 + $0x3c] sm:$0xf]
        %v632 = vld [vmem:[%s1 + $0x40] sm:$0xf]
        %v633 = vld [vmem:[%s1 + $0x44] sm:$0xf]
        %v634 = vld [vmem:[%s1 + $0x48] sm:$0xf]
        %v635 = vld [vmem:[%s1 + $0x4c] sm:$0xf]
        %v636 = vld [vmem:[%s1 + $0x50] sm:$0xf]
        %v637 = vld [vmem:[%s1 + $0x54] sm:$0xf]
        %v638 = vld [vmem:[%s1 + $0x58] sm:$0xf]
        %v639 = vld [vmem:[%s1 + $0x5c] sm:$0xf]
        %v640 = vld [vmem:[%s1 + $0x60] sm:$0xf]
        %v641 = vld [vmem:[%s1 + $0x64] sm:$0xf]
        %v642 = vld [vmem:[%s1 + $0x68] sm:$0xf]
        %v643 = vld [vmem:[%s1 + $0x6c] sm:$0xf]
        %v644 = vld [vmem:[%s1 + $0x70] sm:$0xf]
        %v645 = vld [vmem:[%s1 + $0x74] sm:$0xf]
        %v646 = vld [vmem:[%s1 + $0x78] sm:$0xf]
        %v647 = vld [vmem:[%s1 + $0x7c] sm:$0xf]
        %v648 = vld [vmem:[%s1 + $0x80] sm:$0xf]
        %v649 = vld [vmem:[%s1 + $0x84] sm:$0xf]
        %v650 = vld [vmem:[%s1 + $0x88] sm:$0xf]
        %v651 = vld [vmem:[%s1 + $0x8c] sm:$0xf]
        %v652 = vld [vmem:[%s1 + $0x90] sm:$0xf]
        %v653 = vld [vmem:[%s1 + $0x94] sm:$0xf]
        %v654 = vld [vmem:[%s1 + $0x98] sm:$0xf]
        %v655 = vld [vmem:[%s1 + $0x9c] sm:$0xf]
        %v656 = vld [vmem:[%s1 + $0xa0] sm:$0xf]
        %v657 = vld [vmem:[%s1 + $0xa4] sm:$0xf]
        %v658 = vld [vmem:[%s1 + $0xa8] sm:$0xf]
        %v659 = vld [vmem:[%s1 + $0xac] sm:$0xf]
        %v660 = vld [vmem:[%s1 + $0xb0] sm:$0xf]
        %v661 = vld [vmem:[%s1 + $0xb4] sm:$0xf]
        %v662 = vld [vmem:[%s1 + $0xb8] sm:$0xf]
        %v663 = vld [vmem:[%s1 + $0xbc] sm:$0xf]
        %v664 = vld [vmem:[%s1 + $0xc0] sm:$0xf]
        %v665 = vld [vmem:[%s1 + $0xc4] sm:$0xf]
        %v666 = vld [vmem:[%s1 + $0xc8] sm:$0xf]
        %v667 = vld [vmem:[%s1 + $0xcc] sm:$0xf]
        %v668 = vld [vmem:[%s1 + $0xd0] sm:$0xf]
        %v669 = vld [vmem:[%s1 + $0xd4] sm:$0xf]
        %v670 = vld [vmem:[%s1 + $0xd8] sm:$0xf]
        %v671 = vld [vmem:[%s1 + $0xdc] sm:$0xf]
        %v672 = vld [vmem:[%s1 + $0xe0] sm:$0xf]
        %v673 = vld [vmem:[%s1 + $0xe4] sm:$0xf]
        %v674 = vld [vmem:[%s1 + $0xe8] sm:$0xf]
        %v675 = vld [vmem:[%s1 + $0xec] sm:$0xf]
        %v676 = vld [vmem:[%s1 + $0xf0] sm:$0xf]
        %v677 = vld [vmem:[%s1 + $0xf4] sm:$0xf]
        %v678 = vld [vmem:[%s1 + $0xf8] sm:$0xf]
        %v679 = vld [vmem:[%s1 + $0xfc] sm:$0xf]
        %v680 = vld [vmem:[%s1 + $0x100] sm:$0xf]
        %v681 = vld [vmem:[%s1 + $0x104] sm:$0xf]
        %v682 = vld [vmem:[%s1 + $0x108] sm:$0xf]
        %v683 = vld [vmem:[%s1 + $0x10c] sm:$0xf]
        %v684 = vld [vmem:[%s1 + $0x110] sm:$0xf]
        %v685 = vld [vmem:[%s1 + $0x114] sm:$0xf]
        %v686 = vld [vmem:[%s1 + $0x118] sm:$0xf]
        %v687 = vld [vmem:[%s1 + $0x11c] sm:$0xf]
        %v688 = vld [vmem:[%s1 + $0x120] sm:$0xf]
        %v689 = vld [vmem:[%s1 + $0x124] sm:$0xf]
        %v690 = vld [vmem:[%s1 + $0x128] sm:$0xf]
        %v691 = vld [vmem:[%s1 + $0x12c] sm:$0xf]
        %v692 = vld [vmem:[%s1 + $0x130] sm:$0xf]
        %v693 = vld [vmem:[%s1 + $0x134] sm:$0xf]
        %v694 = vld [vmem:[%s1 + $0x138] sm:$0xf]
        %v695 = vld [vmem:[%s1 + $0x13c] sm:$0xf]
        %v696 = vld [vmem:[%s1 + $0x140] sm:$0xf]
        %v697 = vld [vmem:[%s1 + $0x144] sm:$0xf]
        %v698 = vld [vmem:[%s1 + $0x148] sm:$0xf]
        %v699 = vld [vmem:[%s1 + $0x14c] sm:$0xf]
        %v700 = vld [vmem:[%s1 + $0x150] sm:$0xf]
        %v701 = vld [vmem:[%s1 + $0x154] sm:$0xf]
        %v702 = vld [vmem:[%s1 + $0x158] sm:$0xf]
        %v703 = vld [vmem:[%s1 + $0x15c] sm:$0xf]
        %v704 = vld [vmem:[%s1 + $0x160] sm:$0xf]
        %v705 = vld [vmem:[%s1 + $0x164] sm:$0xf]
        %v706 = vld [vmem:[%s1 + $0x168] sm:$0xf]
        %v707 = vld [vmem:[%s1 + $0x16c] sm:$0xf]
        %v708 = vld [vmem:[%s1 + $0x170] sm:$0xf]
        %v709 = vld [vmem:[%s1 + $0x174] sm:$0xf]
        %v710 = vld [vmem:[%s1 + $0x178] sm:$0xf]
        %v711 = vld [vmem:[%s1 + $0x17c] sm:$0xf]
        %v712 = vld [vmem:[%s1 + $0x180] sm:$0xf]
        %v713 = vld [vmem:[%s1 + $0x184] sm:$0xf]
        %v714 = vld [vmem:[%s5] sm:$0x1]
        %v716 = vperm.slane %v714, 0
        %v816 = vunpack.c.l.b16 %v616
        %v817 = vunpack.c.l.b16 %v617
        %v818 = vunpack.c.l.b16 %v618
        %v819 = vunpack.c.l.b16 %v619
        %v820 = vunpack.c.l.b16 %v620
        %v821 = vunpack.c.l.b16 %v621
        %v822 = vunpack.c.l.b16 %v622
        %v823 = vunpack.c.l.b16 %v623
        %v824 = vunpack.c.l.b16 %v624
        %v825 = vunpack.c.l.b16 %v625
        %v826 = vunpack.c.l.b16 %v626
        %v827 = vunpack.c.l.b16 %v627
        %v828 = vunpack.c.l.b16 %v628
        %v829 = vunpack.c.l.b16 %v629
        %v830 = vunpack.c.l.b16 %v630
        %v831 = vunpack.c.l.b16 %v631
        %v832 = vunpack.c.l.b16 %v632
        %v833 = vunpack.c.l.b16 %v633
        %v834 = vunpack.c.l.b16 %v634
        %v835 = vunpack.c.l.b16 %v635
        %v836 = vunpack.c.l.b16 %v636
        %v837 = vunpack.c.l.b16 %v637
        %v838 = vunpack.c.l.b16 %v638
        %v839 = vunpack.c.l.b16 %v639
        %v840 = vunpack.c.l.b16 %v640
        %v841 = vunpack.c.l.b16 %v641
        %v842 = vunpack.c.l.b16 %v642
        %v843 = vunpack.c.l.b16 %v643
        %v844 = vunpack.c.l.b16 %v644
        %v845 = vunpack.c.l.b16 %v645
        %v846 = vunpack.c.l.b16 %v646
        %v847 = vunpack.c.l.b16 %v647
        %v848 = vunpack.c.l.b16 %v648
        %v849 = vunpack.c.l.b16 %v649
        %v850 = vunpack.c.l.b16 %v650
        %v851 = vunpack.c.l.b16 %v651
        %v852 = vunpack.c.l.b16 %v652
        %v853 = vunpack.c.l.b16 %v653
        %v854 = vunpack.c.l.b16 %v654
        %v855 = vunpack.c.l.b16 %v655
        %v856 = vunpack.c.l.b16 %v656
        %v857 = vunpack.c.l.b16 %v657
        %v858 = vunpack.c.l.b16 %v658
        %v859 = vunpack.c.l.b16 %v659
        %v860 = vunpack.c.l.b16 %v660
        %v861 = vunpack.c.l.b16 %v661
        %v862 = vunpack.c.l.b16 %v662
        %v863 = vunpack.c.l.b16 %v663
        %v864 = vunpack.c.l.b16 %v664
        %v865 = vunpack.c.l.b16 %v665
        %v866 = vunpack.c.l.b16 %v666
        %v867 = vunpack.c.l.b16 %v667
        %v868 = vunpack.c.l.b16 %v668
        %v869 = vunpack.c.l.b16 %v669
        %v870 = vunpack.c.l.b16 %v670
        %v871 = vunpack.c.l.b16 %v671
        %v872 = vunpack.c.l.b16 %v672
        %v873 = vunpack.c.l.b16 %v673
        %v874 = vunpack.c.l.b16 %v674
        %v875 = vunpack.c.l.b16 %v675
        %v876 = vunpack.c.l.b16 %v676
        %v877 = vunpack.c.l.b16 %v677
        %v878 = vunpack.c.l.b16 %v678
        %v879 = vunpack.c.l.b16 %v679
        %v880 = vunpack.c.l.b16 %v680
        %v881 = vunpack.c.l.b16 %v681
        %v882 = vunpack.c.l.b16 %v682
        %v883 = vunpack.c.l.b16 %v683
        %v884 = vunpack.c.l.b16 %v684
        %v885 = vunpack.c.l.b16 %v685
        %v886 = vunpack.c.l.b16 %v686
        %v887 = vunpack.c.l.b16 %v687
        %v888 = vunpack.c.l.b16 %v688
        %v889 = vunpack.c.l.b16 %v689
        %v890 = vunpack.c.l.b16 %v690
        %v891 = vunpack.c.l.b16 %v691
        %v892 = vunpack.c.l.b16 %v692
        %v893 = vunpack.c.l.b16 %v693
        %v894 = vunpack.c.l.b16 %v694
        %v895 = vunpack.c.l.b16 %v695
        %v896 = vunpack.c.l.b16 %v696
        %v897 = vunpack.c.l.b16 %v697
        %v898 = vunpack.c.l.b16 %v698
        %v899 = vunpack.c.l.b16 %v699
        %v900 = vunpack.c.l.b16 %v700
        %v901 = vunpack.c.l.b16 %v701
        %v902 = vunpack.c.l.b16 %v702
        %v903 = vunpack.c.l.b16 %v703
        %v904 = vunpack.c.l.b16 %v704
        %v905 = vunpack.c.l.b16 %v705
        %v906 = vunpack.c.l.b16 %v706
        %v907 = vunpack.c.l.b16 %v707
        %v908 = vunpack.c.l.b16 %v708
        %v909 = vunpack.c.l.b16 %v709
        %v910 = vunpack.c.l.b16 %v710
        %v911 = vunpack.c.l.b16 %v711
        %v912 = vunpack.c.l.b16 %v712
        %v913 = vunpack.c.l.b16 %v713
        %v914 = vpack.c.b16 %v817, %v816
        %v915 = vpack.c.b16 %v819, %v818
        %v916 = vpack.c.b16 %v821, %v820
        %v917 = vpack.c.b16 %v823, %v822
        %v918 = vpack.c.b16 %v825, %v824
        %v919 = vpack.c.b16 %v827, %v826
        %v920 = vpack.c.b16 %v829, %v828
        %v921 = vpack.c.b16 %v831, %v830
        %v922 = vpack.c.b16 %v833, %v832
        %v923 = vpack.c.b16 %v835, %v834
        %v924 = vpack.c.b16 %v837, %v836
        %v925 = vpack.c.b16 %v839, %v838
        %v926 = vpack.c.b16 %v841, %v840
        %v927 = vpack.c.b16 %v843, %v842
        %v928 = vpack.c.b16 %v845, %v844
        %v929 = vpack.c.b16 %v847, %v846
        %v930 = vpack.c.b16 %v849, %v848
        %v931 = vpack.c.b16 %v851, %v850
        %v932 = vpack.c.b16 %v853, %v852
        %v933 = vpack.c.b16 %v855, %v854
        %v934 = vpack.c.b16 %v857, %v856
        %v935 = vpack.c.b16 %v859, %v858
        %v936 = vpack.c.b16 %v861, %v860
        %v937 = vpack.c.b16 %v863, %v862
        %v938 = vpack.c.b16 %v865, %v864
        %v939 = vpack.c.b16 %v867, %v866
        %v940 = vpack.c.b16 %v869, %v868
        %v941 = vpack.c.b16 %v871, %v870
        %v942 = vpack.c.b16 %v873, %v872
        %v943 = vpack.c.b16 %v875, %v874
        %v944 = vpack.c.b16 %v877, %v876
        %v945 = vpack.c.b16 %v879, %v878
        %v946 = vpack.c.b16 %v881, %v880
        %v947 = vpack.c.b16 %v883, %v882
        %v948 = vpack.c.b16 %v885, %v884
        %v949 = vpack.c.b16 %v887, %v886
        %v950 = vpack.c.b16 %v889, %v888
        %v951 = vpack.c.b16 %v891, %v890
        %v952 = vpack.c.b16 %v893, %v892
        %v953 = vpack.c.b16 %v895, %v894
        %v954 = vpack.c.b16 %v897, %v896
        %v955 = vpack.c.b16 %v899, %v898
        %v956 = vpack.c.b16 %v901, %v900
        %v957 = vpack.c.b16 %v903, %v902
        %v958 = vpack.c.b16 %v905, %v904
        %v959 = vpack.c.b16 %v907, %v906
        %v960 = vpack.c.b16 %v909, %v908
        %v961 = vpack.c.b16 %v911, %v910
        %v962 = vpack.c.b16 %v913, %v912
        %vm1012 = vcmask 130048
        %v1014 = vsel %vm1012, %v615, 0
        %1016 = vmatpush.bf16.msra.mxu0 %v921
        %1017 = vmatpush.bf16.msra.mxu0 %v920
        %1018 = vmatpush.bf16.msra.mxu0 %v919
        %1019 = vmatpush.bf16.msra.mxu0 %v918
        %1020 = vmatpush.bf16.msra.mxu0 %v917
        %1021 = vmatpush.bf16.msra.mxu0 %v916
        %1022 = vmatpush.bf16.msra.mxu0 %v915
        %1023 = vmatpush.bf16.msra.mxu0 %v914
        %1024 = vmatmul.bf16.gmra.mxu0 %v609
        %v1025 = vpop.f32.mrf.mxu0
        %v1026 = vadd.f32 %v716, %v1025
        %v1027 = vpop.f32.mrf.mxu0
        %v1028 = vadd.f32 %v716, %v1027
        %1029 = vdwg.mxu0
        %1030 = vmatpush.bf16.msra.mxu0 %v929
        %1031 = vmatpush.bf16.msra.mxu0 %v928
        %1032 = vmatpush.bf16.msra.mxu0 %v927
        %1033 = vmatpush.bf16.msra.mxu0 %v926
        %1034 = vmatpush.bf16.msra.mxu0 %v925
        %1035 = vmatpush.bf16.msra.mxu0 %v924
        %1036 = vmatpush.bf16.msra.mxu0 %v923
        %1037 = vmatpush.bf16.msra.mxu0 %v922
        %1038 = vmatmul.bf16.gmra.mxu0 %v610
        %v1039 = vpop.f32.mrf.mxu0
        %v1040 = vadd.f32 %v1026, %v1039
        %v1041 = vpop.f32.mrf.mxu0
        %v1042 = vadd.f32 %v1028, %v1041
        %1043 = vdwg.mxu0
        %1044 = vmatpush.bf16.msra.mxu0 %v937
        %1045 = vmatpush.bf16.msra.mxu0 %v936
        %1046 = vmatpush.bf16.msra.mxu0 %v935
        %1047 = vmatpush.bf16.msra.mxu0 %v934
        %1048 = vmatpush.bf16.msra.mxu0 %v933
        %1049 = vmatpush.bf16.msra.mxu0 %v932
        %1050 = vmatpush.bf16.msra.mxu0 %v931
        %1051 = vmatpush.bf16.msra.mxu0 %v930
        %1052 = vmatmul.bf16.gmra.mxu0 %v611
        %v1053 = vpop.f32.mrf.mxu0
        %v1054 = vadd.f32 %v1040, %v1053
        %v1055 = vpop.f32.mrf.mxu0
        %v1056 = vadd.f32 %v1042, %v1055
        %1057 = vdwg.mxu0
        %1058 = vmatpush.bf16.msra.mxu0 %v945
        %1059 = vmatpush.bf16.msra.mxu0 %v944
        %1060 = vmatpush.bf16.msra.mxu0 %v943
        %1061 = vmatpush.bf16.msra.mxu0 %v942
        %1062 = vmatpush.bf16.msra.mxu0 %v941
        %1063 = vmatpush.bf16.msra.mxu0 %v940
        %1064 = vmatpush.bf16.msra.mxu0 %v939
        %1065 = vmatpush.bf16.msra.mxu0 %v938
        %1066 = vmatmul.bf16.gmra.mxu0 %v612
        %v1067 = vpop.f32.mrf.mxu0
        %v1068 = vadd.f32 %v1054, %v1067
        %v1069 = vpop.f32.mrf.mxu0
        %v1070 = vadd.f32 %v1056, %v1069
        %1071 = vdwg.mxu0
        %1072 = vmatpush.bf16.msra.mxu0 %v953
        %1073 = vmatpush.bf16.msra.mxu0 %v952
        %1074 = vmatpush.bf16.msra.mxu0 %v951
        %1075 = vmatpush.bf16.msra.mxu0 %v950
        %1076 = vmatpush.bf16.msra.mxu0 %v949
        %1077 = vmatpush.bf16.msra.mxu0 %v948
        %1078 = vmatpush.bf16.msra.mxu0 %v947
        %1079 = vmatpush.bf16.msra.mxu0 %v946
        %1080 = vmatmul.bf16.gmra.mxu0 %v613
        %v1081 = vpop.f32.mrf.mxu0
        %v1082 = vadd.f32 %v1068, %v1081
        %v1083 = vpop.f32.mrf.mxu0
        %v1084 = vadd.f32 %v1070, %v1083
        %1085 = vdwg.mxu0
        %1086 = vmatpush.bf16.msra.mxu0 %v961
        %1087 = vmatpush.bf16.msra.mxu0 %v960
        %1088 = vmatpush.bf16.msra.mxu0 %v959
        %1089 = vmatpush.bf16.msra.mxu0 %v958
        %1090 = vmatpush.bf16.msra.mxu0 %v957
        %1091 = vmatpush.bf16.msra.mxu0 %v956
        %1092 = vmatpush.bf16.msra.mxu0 %v955
        %1093 = vmatpush.bf16.msra.mxu0 %v954
        %1094 = vmatmul.bf16.gmra.mxu0 %v614
        %v1095 = vpop.f32.mrf.mxu0
        %v1096 = vadd.f32 %v1082, %v1095
        %v1097 = vpop.f32.mrf.mxu0
        %v1098 = vadd.f32 %v1084, %v1097
        %1099 = vdwg.mxu0
        %1100 = vmatpush.bf16.msra.mxu0 0
        %1101 = vmatpush.bf16.msra.mxu0 0
        %1102 = vmatpush.bf16.msra.mxu0 0
        %1103 = vmatpush.bf16.msra.mxu0 0
        %1104 = vmatpush.bf16.msra.mxu0 0
        %1105 = vmatpush.bf16.msra.mxu0 0
        %1106 = vmatpush.bf16.msra.mxu0 0
        %1107 = vmatpush.bf16.msra.mxu0 %v962
        %1108 = vmatmul.bf16.gmra.mxu0 %v1014
        %v1109 = vpop.f32.mrf.mxu0
        %v1110 = vadd.f32 %v1096, %v1109
        %v1111 = vpop.f32.mrf.mxu0
        %v1112 = vadd.f32 %v1098, %v1111
        %1113 = vdwg.mxu0
        %v1114 = vtanh.pop %v1110
        %v1115 = vtanh.pop %v1112
        %v1116 = vpack.c.bf16 %v1115, %v1114
        %v1117 = vld [vmem:[%s2] sm:$0xf]
        %v1118 = vld [vmem:[%s2 + $0x4] sm:$0xf]
        %v1119 = vld [vmem:[%s2 + $0x8] sm:$0xf]
        %v1120 = vld [vmem:[%s2 + $0xc] sm:$0xf]
        %v1121 = vld [vmem:[%s2 + $0x10] sm:$0xf]
        %v1122 = vld [vmem:[%s2 + $0x14] sm:$0xf]
        %v1123 = vld [vmem:[%s2 + $0x18] sm:$0xf]
        %v1124 = vld [vmem:[%s2 + $0x1c] sm:$0xf]
        %v1125 = vld [vmem:[%s2 + $0x20] sm:$0xf]
        %v1126 = vld [vmem:[%s2 + $0x24] sm:$0xf]
        %v1127 = vld [vmem:[%s2 + $0x28] sm:$0xf]
        %v1128 = vld [vmem:[%s2 + $0x2c] sm:$0xf]
        %v1129 = vld [vmem:[%s2 + $0x30] sm:$0xf]
        %v1130 = vld [vmem:[%s2 + $0x34] sm:$0xf]
        %v1131 = vld [vmem:[%s2 + $0x38] sm:$0xf]
        %v1132 = vld [vmem:[%s2 + $0x3c] sm:$0xf]
        %v1133 = vld [vmem:[%s6] sm:$0x1]
        %v1135 = vperm.slane %v1133, 0
        %v1153 = vunpack.c.l.b16 %v1117
        %v1154 = vunpack.c.l.b16 %v1118
        %v1155 = vunpack.c.l.b16 %v1119
        %v1156 = vunpack.c.l.b16 %v1120
        %v1157 = vunpack.c.l.b16 %v1121
        %v1158 = vunpack.c.l.b16 %v1122
        %v1159 = vunpack.c.l.b16 %v1123
        %v1160 = vunpack.c.l.b16 %v1124
        %v1161 = vunpack.c.l.b16 %v1125
        %v1162 = vunpack.c.l.b16 %v1126
        %v1163 = vunpack.c.l.b16 %v1127
        %v1164 = vunpack.c.l.b16 %v1128
        %v1165 = vunpack.c.l.b16 %v1129
        %v1166 = vunpack.c.l.b16 %v1130
        %v1167 = vunpack.c.l.b16 %v1131
        %v1168 = vunpack.c.l.b16 %v1132
        %v1169 = vpack.c.b16 %v1154, %v1153
        %v1170 = vpack.c.b16 %v1156, %v1155
        %v1171 = vpack.c.b16 %v1158, %v1157
        %v1172 = vpack.c.b16 %v1160, %v1159
        %v1173 = vpack.c.b16 %v1162, %v1161
        %v1174 = vpack.c.b16 %v1164, %v1163
        %v1175 = vpack.c.b16 %v1166, %v1165
        %v1176 = vpack.c.b16 %v1168, %v1167
        %1185 = vmatpush.bf16.msra.mxu0 %v1176
        %1186 = vmatpush.bf16.msra.mxu0 %v1175
        %1187 = vmatpush.bf16.msra.mxu0 %v1174
        %1188 = vmatpush.bf16.msra.mxu0 %v1173
        %1189 = vmatpush.bf16.msra.mxu0 %v1172
        %1190 = vmatpush.bf16.msra.mxu0 %v1171
        %1191 = vmatpush.bf16.msra.mxu0 %v1170
        %1192 = vmatpush.bf16.msra.mxu0 %v1169
        %1193 = vmatmul.bf16.gmra.mxu0 %v1116
        %v1194 = vpop.f32.mrf.mxu0
        %v1195 = vadd.f32 %v1135, %v1194
        %v1196 = vpop.f32.mrf.mxu0
        %v1197 = vadd.f32 %v1135, %v1196
        %1198 = vdwg.mxu0
        %v1199 = vtanh.pop %v1195
        %v1200 = vtanh.pop %v1197
        %v1201 = vpack.c.bf16 %v1200, %v1199
        %v1202 = vld [vmem:[%s3] sm:$0xf]
        %v1203 = vld [vmem:[%s3 + $0x4] sm:$0xf]
        %v1204 = vld [vmem:[%s3 + $0x8] sm:$0xf]
        %v1205 = vld [vmem:[%s3 + $0xc] sm:$0xf]
        %v1206 = vld [vmem:[%s3 + $0x10] sm:$0xf]
        %v1207 = vld [vmem:[%s3 + $0x14] sm:$0xf]
        %v1208 = vld [vmem:[%s3 + $0x18] sm:$0xf]
        %v1209 = vld [vmem:[%s3 + $0x1c] sm:$0xf]
        %v1210 = vld [vmem:[%s7] sm:$0x1]
        %v1212 = vperm.slane %v1210, 0
        %v1222 = vunpack.c.l.b16 %v1202
        %v1223 = vunpack.c.l.b16 %v1203
        %v1224 = vunpack.c.l.b16 %v1204
        %v1225 = vunpack.c.l.b16 %v1205
        %v1226 = vunpack.c.l.b16 %v1206
        %v1227 = vunpack.c.l.b16 %v1207
        %v1228 = vunpack.c.l.b16 %v1208
        %v1229 = vunpack.c.l.b16 %v1209
        %v1230 = vpack.c.b16 %v1223, %v1222
        %v1231 = vpack.c.b16 %v1225, %v1224
        %v1232 = vpack.c.b16 %v1227, %v1226
        %v1233 = vpack.c.b16 %v1229, %v1228
        %vm1238 = vcmask 523264
        %v1240 = vsel %vm1238, %v1201, 0
        %1242 = vmatpush.bf16.msra.mxu0 0
        %1243 = vmatpush.bf16.msra.mxu0 0
        %1244 = vmatpush.bf16.msra.mxu0 0
        %1245 = vmatpush.bf16.msra.mxu0 0
        %1246 = vmatpush.bf16.msra.mxu0 %v1233
        %1247 = vmatpush.bf16.msra.mxu0 %v1232
        %1248 = vmatpush.bf16.msra.mxu0 %v1231
        %1249 = vmatpush.bf16.msra.mxu0 %v1230
        %1250 = vmatmul.bf16.gmra.mxu0 %v1240
        %v1251 = vpop.f32.mrf.mxu0
        %v1252 = vadd.f32 %v1212, %v1251
        %v1253 = vpop.f32.mrf.mxu0
        %v1254 = vadd.f32 %v1212, %v1253
        %1255 = vdwg.mxu0
        %v1256 = vtanh.pop %v1252
        %v1257 = vtanh.pop %v1254
        %v1258 = vpack.c.bf16 %v1257, %v1256
        %v1259 = vld [vmem:[%s4] sm:$0xf]
        %v1260 = vld [vmem:[%s4 + $0x4] sm:$0x3]
        %v1261 = vld [vmem:[%s8] sm:$0x1]
        %v1263 = vperm.slane %v1261, 0
        %v1267 = vunpack.c.l.b16 %v1259
        %v1268 = vunpack.c.l.b16 %v1260
        %v1269 = vpack.c.b16 %v1268, %v1267
        %vm1270 = vcmask 97280
        %v1272 = vsel %vm1270, %v1258, 0
        %vm1274 = vcmask 1045504
        %v1276 = vsel %vm1274, %v1269, 0
        %1278 = vmatpush.bf16.msra.mxu0 0
        %1279 = vmatpush.bf16.msra.mxu0 0
        %1280 = vmatpush.bf16.msra.mxu0 0
        %1281 = vmatpush.bf16.msra.mxu0 0
        %1282 = vmatpush.bf16.msra.mxu0 0
        %1283 = vmatpush.bf16.msra.mxu0 0
        %1284 = vmatpush.bf16.msra.mxu0 0
        %1285 = vmatpush.bf16.msra.mxu0 %v1276
        %1286 = vmatmul.bf16.gmra.mxu0 %v1272
        %v1287 = vpop.f32.mrf.mxu0
        %v1288 = vadd.f32 %v1263, %v1287
        %v1289 = vpop.f32.mrf.mxu0
        %v1290 = vadd.f32 %v1263, %v1289
        %1291 = vdwg.mxu0
        %vm1292 = vcmask 23552
        %1293 = vst.msk [vmem:[%s591] sm:$0xff] %vm1292, %v1288
        %1294 = vst.msk [vmem:[%s591 + $0x8] sm:$0xff] %vm1292, %v1290
        %v1295 = vpack.c.bf16 %v1290, %v1288
        %v1296 = vld [vmem:[%s9] sm:$0x3]
        %v1297 = vld [vmem:[%s13] sm:$0x1]
        %v1299 = vperm.slane %v1297, 0
        %v1302 = vsel %vm1292, %v1295, 0
        %vm1304 = vcmask 1040384
        %vm1305 = vcmask 1041408
        %v1306 = vsel %vm1304, 4294967295, 65535
        %v1307 = vsel %vm1305, %v1306, 0
        %v1309 = vand.u32 %v1296, %v1307
        %1311 = vmatpush.bf16.msra.mxu0 0
        %1312 = vmatpush.bf16.msra.mxu0 0
        %1313 = vmatpush.bf16.msra.mxu0 0
        %1314 = vmatpush.bf16.msra.mxu0 0
        %1315 = vmatpush.bf16.msra.mxu0 0
        %1316 = vmatpush.bf16.msra.mxu0 0
        %1317 = vmatpush.bf16.msra.mxu0 0
        %1318 = vmatpush.bf16.msra.mxu0 %v1309
        %1319 = vmatmul.bf16.gmra.mxu0 %v1302
        %v1320 = vpop.f32.mrf.mxu0
        %v1321 = vadd.f32 %v1299, %v1320
        %v1322 = vpop.f32.mrf.mxu0
        %v1323 = vadd.f32 %v1299, %v1322
        %1324 = vdwg.mxu0
        %v1325 = vtanh.pop %v1321
        %v1326 = vtanh.pop %v1323
        %v1327 = vpack.c.bf16 %v1326, %v1325
        %v1328 = vld [vmem:[%s10] sm:$0xf]
        %v1329 = vld [vmem:[%s10 + $0x4] sm:$0x3]
        %v1330 = vld [vmem:[%s14] sm:$0x1]
        %v1332 = vperm.slane %v1330, 0
        %v1336 = vunpack.c.l.b16 %v1328
        %v1337 = vunpack.c.l.b16 %v1329
        %v1338 = vpack.c.b16 %v1337, %v1336
        %v1340 = vsel %vm1270, %v1327, 0
        %v1343 = vsel %vm1274, %v1338, 0
        %1345 = vmatpush.bf16.msra.mxu0 0
        %1346 = vmatpush.bf16.msra.mxu0 0
        %1347 = vmatpush.bf16.msra.mxu0 0
        %1348 = vmatpush.bf16.msra.mxu0 0
        %1349 = vmatpush.bf16.msra.mxu0 0
        %1350 = vmatpush.bf16.msra.mxu0 0
        %1351 = vmatpush.bf16.msra.mxu0 0
        %1352 = vmatpush.bf16.msra.mxu0 %v1343
        %1353 = vmatmul.bf16.gmra.mxu0 %v1340
        %v1354 = vpop.f32.mrf.mxu0
        %v1355 = vadd.f32 %v1332, %v1354
        %v1356 = vpop.f32.mrf.mxu0
        %v1357 = vadd.f32 %v1332, %v1356
        %1358 = vdwg.mxu0
        %v1359 = vtanh.pop %v1355
        %v1360 = vtanh.pop %v1357
        %v1361 = vpack.c.bf16 %v1360, %v1359
        %v1362 = vld [vmem:[%s11] sm:$0xf]
        %v1363 = vld [vmem:[%s11 + $0x4] sm:$0xf]
        %v1364 = vld [vmem:[%s11 + $0x8] sm:$0xf]
        %v1365 = vld [vmem:[%s11 + $0xc] sm:$0xf]
        %v1366 = vld [vmem:[%s11 + $0x10] sm:$0xf]
        %v1367 = vld [vmem:[%s11 + $0x14] sm:$0xf]
        %v1368 = vld [vmem:[%s11 + $0x18] sm:$0xf]
        %v1369 = vld [vmem:[%s11 + $0x1c] sm:$0xf]
        %v1370 = vld [vmem:[%s15] sm:$0x1]
        %v1372 = vperm.slane %v1370, 0
        %v1382 = vunpack.c.l.b16 %v1362
        %v1383 = vunpack.c.l.b16 %v1363
        %v1384 = vunpack.c.l.b16 %v1364
        %v1385 = vunpack.c.l.b16 %v1365
        %v1386 = vunpack.c.l.b16 %v1366
        %v1387 = vunpack.c.l.b16 %v1367
        %v1388 = vunpack.c.l.b16 %v1368
        %v1389 = vunpack.c.l.b16 %v1369
        %v1390 = vpack.c.b16 %v1383, %v1382
        %v1391 = vpack.c.b16 %v1385, %v1384
        %v1392 = vpack.c.b16 %v1387, %v1386
        %v1393 = vpack.c.b16 %v1389, %v1388
        %v1399 = vsel %vm1238, %v1361, 0
        %1401 = vmatpush.bf16.msra.mxu0 0
        %1402 = vmatpush.bf16.msra.mxu0 0
        %1403 = vmatpush.bf16.msra.mxu0 0
        %1404 = vmatpush.bf16.msra.mxu0 0
        %1405 = vmatpush.bf16.msra.mxu0 %v1393
        %1406 = vmatpush.bf16.msra.mxu0 %v1392
        %1407 = vmatpush.bf16.msra.mxu0 %v1391
        %1408 = vmatpush.bf16.msra.mxu0 %v1390
        %1409 = vmatmul.bf16.gmra.mxu0 %v1399
        %v1410 = vpop.f32.mrf.mxu0
        %v1411 = vadd.f32 %v1372, %v1410
        %v1412 = vpop.f32.mrf.mxu0
        %v1413 = vadd.f32 %v1372, %v1412
        %1414 = vdwg.mxu0
        %v1415 = vtanh.pop %v1411
        %v1416 = vtanh.pop %v1413
        %v1417 = vpack.c.bf16 %v1416, %v1415
        %v1418 = vld [vmem:[%s12] sm:$0xff]
        %v1419 = vld [vmem:[%s12 + $0x8] sm:$0xff]
        %v1420 = vld [vmem:[%s12 + $0x10] sm:$0xff]
        %v1421 = vld [vmem:[%s12 + $0x18] sm:$0xf]
        %v1422 = vld [vmem:[%s12 + $0x1c] sm:$0xff]
        %v1423 = vld [vmem:[%s12 + $0x24] sm:$0xff]
        %v1424 = vld [vmem:[%s12 + $0x2c] sm:$0xff]
        %v1425 = vld [vmem:[%s12 + $0x34] sm:$0xf]
        %v1426 = vld [vmem:[%s12 + $0x38] sm:$0xff]
        %v1427 = vld [vmem:[%s12 + $0x40] sm:$0xff]
        %v1428 = vld [vmem:[%s12 + $0x48] sm:$0xff]
        %v1429 = vld [vmem:[%s12 + $0x50] sm:$0xf]
        %v1430 = vld [vmem:[%s12 + $0x54] sm:$0xff]
        %v1431 = vld [vmem:[%s12 + $0x5c] sm:$0xff]
        %v1432 = vld [vmem:[%s12 + $0x64] sm:$0xff]
        %v1433 = vld [vmem:[%s12 + $0x6c] sm:$0xf]
        %v1434 = vld [vmem:[%s12 + $0x70] sm:$0xff]
        %v1435 = vld [vmem:[%s12 + $0x78] sm:$0xff]
        %v1436 = vld [vmem:[%s12 + $0x80] sm:$0xff]
        %v1437 = vld [vmem:[%s12 + $0x88] sm:$0xf]
        %v1438 = vld [vmem:[%s12 + $0x8c] sm:$0xff]
        %v1439 = vld [vmem:[%s12 + $0x94] sm:$0xff]
        %v1440 = vld [vmem:[%s12 + $0x9c] sm:$0xff]
        %v1441 = vld [vmem:[%s12 + $0xa4] sm:$0xf]
        %v1442 = vld [vmem:[%s12 + $0xa8] sm:$0xff]
        %v1443 = vld [vmem:[%s12 + $0xb0] sm:$0xff]
        %v1444 = vld [vmem:[%s12 + $0xb8] sm:$0xff]
        %v1445 = vld [vmem:[%s12 + $0xc0] sm:$0xf]
        %v1446 = vld [vmem:[%s12 + $0xc4] sm:$0xff]
        %v1447 = vld [vmem:[%s12 + $0xcc] sm:$0xff]
        %v1448 = vld [vmem:[%s12 + $0xd4] sm:$0xff]
        %v1449 = vld [vmem:[%s12 + $0xdc] sm:$0xf]
        %v1450 = vld [vmem:[%s12 + $0xe0] sm:$0xff]
        %v1451 = vld [vmem:[%s12 + $0xe8] sm:$0xff]
        %v1452 = vld [vmem:[%s12 + $0xf0] sm:$0xff]
        %v1453 = vld [vmem:[%s12 + $0xf8] sm:$0xf]
        %v1454 = vld [vmem:[%s12 + $0xfc] sm:$0xff]
        %v1455 = vld [vmem:[%s12 + $0x104] sm:$0xff]
        %v1456 = vld [vmem:[%s12 + $0x10c] sm:$0xff]
        %v1457 = vld [vmem:[%s12 + $0x114] sm:$0xf]
        %v1458 = vld [vmem:[%s12 + $0x118] sm:$0xff]
        %v1459 = vld [vmem:[%s12 + $0x120] sm:$0xff]
        %v1460 = vld [vmem:[%s12 + $0x128] sm:$0xff]
        %v1461 = vld [vmem:[%s12 + $0x130] sm:$0xf]
        %v1462 = vld [vmem:[%s12 + $0x134] sm:$0xff]
        %v1463 = vld [vmem:[%s12 + $0x13c] sm:$0xff]
        %v1464 = vld [vmem:[%s12 + $0x144] sm:$0xff]
        %v1465 = vld [vmem:[%s12 + $0x14c] sm:$0xf]
        %v1466 = vld [vmem:[%s12 + $0x150] sm:$0xff]
        %v1467 = vld [vmem:[%s12 + $0x158] sm:$0xff]
        %v1468 = vld [vmem:[%s12 + $0x160] sm:$0xff]
        %v1469 = vld [vmem:[%s12 + $0x168] sm:$0xf]
        %v1470 = vld [vmem:[%s12 + $0x16c] sm:$0xff]
        %v1471 = vld [vmem:[%s12 + $0x174] sm:$0xff]
        %v1472 = vld [vmem:[%s12 + $0x17c] sm:$0xff]
        %v1473 = vld [vmem:[%s12 + $0x184] sm:$0xf]
        %v1474 = vld [vmem:[%s12 + $0x188] sm:$0xff]
        %v1475 = vld [vmem:[%s12 + $0x190] sm:$0xff]
        %v1476 = vld [vmem:[%s12 + $0x198] sm:$0xff]
        %v1477 = vld [vmem:[%s12 + $0x1a0] sm:$0xf]
        %v1478 = vld [vmem:[%s12 + $0x1a4] sm:$0xff]
        %v1479 = vld [vmem:[%s12 + $0x1ac] sm:$0xff]
        %v1480 = vld [vmem:[%s12 + $0x1b4] sm:$0xff]
        %v1481 = vld [vmem:[%s12 + $0x1bc] sm:$0xf]
        %v1482 = vld [vmem:[%s16] sm:$0x7f]
        %v1484 = vperm.slane %v1482, 0
        %v1485 = vperm.slane %v1482, 1
        %v1486 = vperm.slane %v1482, 2
        %v1487 = vperm.slane %v1482, 3
        %v1488 = vperm.slane %v1482, 4
        %v1489 = vperm.slane %v1482, 5
        %v1490 = vperm.slane %v1482, 6
        %v1562 = vunpack.c.l.b16 %v1418
        %v1563 = vunpack.c.h.b16 %v1418
        %v1564 = vunpack.c.l.b16 %v1419
        %v1565 = vunpack.c.h.b16 %v1419
        %v1566 = vunpack.c.l.b16 %v1420
        %v1567 = vunpack.c.h.b16 %v1420
        %v1568 = vunpack.c.l.b16 %v1421
        %v1569 = vunpack.c.l.b16 %v1422
        %v1570 = vunpack.c.h.b16 %v1422
        %v1571 = vunpack.c.l.b16 %v1423
        %v1572 = vunpack.c.h.b16 %v1423
        %v1573 = vunpack.c.l.b16 %v1424
        %v1574 = vunpack.c.h.b16 %v1424
        %v1575 = vunpack.c.l.b16 %v1425
        %v1576 = vunpack.c.l.b16 %v1426
        %v1577 = vunpack.c.h.b16 %v1426
        %v1578 = vunpack.c.l.b16 %v1427
        %v1579 = vunpack.c.h.b16 %v1427
        %v1580 = vunpack.c.l.b16 %v1428
        %v1581 = vunpack.c.h.b16 %v1428
        %v1582 = vunpack.c.l.b16 %v1429
        %v1583 = vunpack.c.l.b16 %v1430
        %v1584 = vunpack.c.h.b16 %v1430
        %v1585 = vunpack.c.l.b16 %v1431
        %v1586 = vunpack.c.h.b16 %v1431
        %v1587 = vunpack.c.l.b16 %v1432
        %v1588 = vunpack.c.h.b16 %v1432
        %v1589 = vunpack.c.l.b16 %v1433
        %v1590 = vunpack.c.l.b16 %v1434
        %v1591 = vunpack.c.h.b16 %v1434
        %v1592 = vunpack.c.l.b16 %v1435
        %v1593 = vunpack.c.h.b16 %v1435
        %v1594 = vunpack.c.l.b16 %v1436
        %v1595 = vunpack.c.h.b16 %v1436
        %v1596 = vunpack.c.l.b16 %v1437
        %v1597 = vunpack.c.l.b16 %v1438
        %v1598 = vunpack.c.h.b16 %v1438
        %v1599 = vunpack.c.l.b16 %v1439
        %v1600 = vunpack.c.h.b16 %v1439
        %v1601 = vunpack.c.l.b16 %v1440
        %v1602 = vunpack.c.h.b16 %v1440
        %v1603 = vunpack.c.l.b16 %v1441
        %v1604 = vunpack.c.l.b16 %v1442
        %v1605 = vunpack.c.h.b16 %v1442
        %v1606 = vunpack.c.l.b16 %v1443
        %v1607 = vunpack.c.h.b16 %v1443
        %v1608 = vunpack.c.l.b16 %v1444
        %v1609 = vunpack.c.h.b16 %v1444
        %v1610 = vunpack.c.l.b16 %v1445
        %v1611 = vunpack.c.l.b16 %v1446
        %v1612 = vunpack.c.h.b16 %v1446
        %v1613 = vunpack.c.l.b16 %v1447
        %v1614 = vunpack.c.h.b16 %v1447
        %v1615 = vunpack.c.l.b16 %v1448
        %v1616 = vunpack.c.h.b16 %v1448
        %v1617 = vunpack.c.l.b16 %v1449
        %v1618 = vunpack.c.l.b16 %v1450
        %v1619 = vunpack.c.h.b16 %v1450
        %v1620 = vunpack.c.l.b16 %v1451
        %v1621 = vunpack.c.h.b16 %v1451
        %v1622 = vunpack.c.l.b16 %v1452
        %v1623 = vunpack.c.h.b16 %v1452
        %v1624 = vunpack.c.l.b16 %v1453
        %v1625 = vunpack.c.l.b16 %v1454
        %v1626 = vunpack.c.h.b16 %v1454
        %v1627 = vunpack.c.l.b16 %v1455
        %v1628 = vunpack.c.h.b16 %v1455
        %v1629 = vunpack.c.l.b16 %v1456
        %v1630 = vunpack.c.h.b16 %v1456
        %v1631 = vunpack.c.l.b16 %v1457
        %v1632 = vunpack.c.l.b16 %v1458
        %v1633 = vunpack.c.h.b16 %v1458
        %v1634 = vunpack.c.l.b16 %v1459
        %v1635 = vunpack.c.h.b16 %v1459
        %v1636 = vunpack.c.l.b16 %v1460
        %v1637 = vunpack.c.h.b16 %v1460
        %v1638 = vunpack.c.l.b16 %v1461
        %v1639 = vunpack.c.l.b16 %v1462
        %v1640 = vunpack.c.h.b16 %v1462
        %v1641 = vunpack.c.l.b16 %v1463
        %v1642 = vunpack.c.h.b16 %v1463
        %v1643 = vunpack.c.l.b16 %v1464
        %v1644 = vunpack.c.h.b16 %v1464
        %v1645 = vunpack.c.l.b16 %v1465
        %v1646 = vunpack.c.l.b16 %v1466
        %v1647 = vunpack.c.h.b16 %v1466
        %v1648 = vunpack.c.l.b16 %v1467
        %v1649 = vunpack.c.h.b16 %v1467
        %v1650 = vunpack.c.l.b16 %v1468
        %v1651 = vunpack.c.h.b16 %v1468
        %v1652 = vunpack.c.l.b16 %v1469
        %v1653 = vunpack.c.l.b16 %v1470
        %v1654 = vunpack.c.h.b16 %v1470
        %v1655 = vunpack.c.l.b16 %v1471
        %v1656 = vunpack.c.h.b16 %v1471
        %v1657 = vunpack.c.l.b16 %v1472
        %v1658 = vunpack.c.h.b16 %v1472
        %v1659 = vunpack.c.l.b16 %v1473
        %v1660 = vunpack.c.l.b16 %v1474
        %v1661 = vunpack.c.h.b16 %v1474
        %v1662 = vunpack.c.l.b16 %v1475
        %v1663 = vunpack.c.h.b16 %v1475
        %v1664 = vunpack.c.l.b16 %v1476
        %v1665 = vunpack.c.h.b16 %v1476
        %v1666 = vunpack.c.l.b16 %v1477
        %v1667 = vunpack.c.l.b16 %v1478
        %v1668 = vunpack.c.h.b16 %v1478
        %v1669 = vunpack.c.l.b16 %v1479
        %v1670 = vunpack.c.h.b16 %v1479
        %v1671 = vunpack.c.l.b16 %v1480
        %v1672 = vunpack.c.h.b16 %v1480
        %v1673 = vunpack.c.l.b16 %v1481
        %v1674 = vpack.c.b16 %v1569, %v1562
        %v1675 = vpack.c.b16 %v1570, %v1563
        %v1676 = vpack.c.b16 %v1571, %v1564
        %v1677 = vpack.c.b16 %v1572, %v1565
        %v1678 = vpack.c.b16 %v1573, %v1566
        %v1679 = vpack.c.b16 %v1574, %v1567
        %v1680 = vpack.c.b16 %v1575, %v1568
        %v1681 = vpack.c.b16 %v1583, %v1576
        %v1682 = vpack.c.b16 %v1584, %v1577
        %v1683 = vpack.c.b16 %v1585, %v1578
        %v1684 = vpack.c.b16 %v1586, %v1579
        %v1685 = vpack.c.b16 %v1587, %v1580
        %v1686 = vpack.c.b16 %v1588, %v1581
        %v1687 = vpack.c.b16 %v1589, %v1582
        %v1688 = vpack.c.b16 %v1597, %v1590
        %v1689 = vpack.c.b16 %v1598, %v1591
        %v1690 = vpack.c.b16 %v1599, %v1592
        %v1691 = vpack.c.b16 %v1600, %v1593
        %v1692 = vpack.c.b16 %v1601, %v1594
        %v1693 = vpack.c.b16 %v1602, %v1595
        %v1694 = vpack.c.b16 %v1603, %v1596
        %v1695 = vpack.c.b16 %v1611, %v1604
        %v1696 = vpack.c.b16 %v1612, %v1605
        %v1697 = vpack.c.b16 %v1613, %v1606
        %v1698 = vpack.c.b16 %v1614, %v1607
        %v1699 = vpack.c.b16 %v1615, %v1608
        %v1700 = vpack.c.b16 %v1616, %v1609
        %v1701 = vpack.c.b16 %v1617, %v1610
        %v1702 = vpack.c.b16 %v1625, %v1618
        %v1703 = vpack.c.b16 %v1626, %v1619
        %v1704 = vpack.c.b16 %v1627, %v1620
        %v1705 = vpack.c.b16 %v1628, %v1621
        %v1706 = vpack.c.b16 %v1629, %v1622
        %v1707 = vpack.c.b16 %v1630, %v1623
        %v1708 = vpack.c.b16 %v1631, %v1624
        %v1709 = vpack.c.b16 %v1639, %v1632
        %v1710 = vpack.c.b16 %v1640, %v1633
        %v1711 = vpack.c.b16 %v1641, %v1634
        %v1712 = vpack.c.b16 %v1642, %v1635
        %v1713 = vpack.c.b16 %v1643, %v1636
        %v1714 = vpack.c.b16 %v1644, %v1637
        %v1715 = vpack.c.b16 %v1645, %v1638
        %v1716 = vpack.c.b16 %v1653, %v1646
        %v1717 = vpack.c.b16 %v1654, %v1647
        %v1718 = vpack.c.b16 %v1655, %v1648
        %v1719 = vpack.c.b16 %v1656, %v1649
        %v1720 = vpack.c.b16 %v1657, %v1650
        %v1721 = vpack.c.b16 %v1658, %v1651
        %v1722 = vpack.c.b16 %v1659, %v1652
        %v1723 = vpack.c.b16 %v1667, %v1660
        %v1724 = vpack.c.b16 %v1668, %v1661
        %v1725 = vpack.c.b16 %v1669, %v1662
        %v1726 = vpack.c.b16 %v1670, %v1663
        %v1727 = vpack.c.b16 %v1671, %v1664
        %v1728 = vpack.c.b16 %v1672, %v1665
        %v1729 = vpack.c.b16 %v1673, %v1666
        %1786 = vmatpush.bf16.msra.mxu0 %v1723
        %1787 = vmatpush.bf16.msra.mxu0 %v1716
        %1788 = vmatpush.bf16.msra.mxu0 %v1709
        %1789 = vmatpush.bf16.msra.mxu0 %v1702
        %1790 = vmatpush.bf16.msra.mxu0 %v1695
        %1791 = vmatpush.bf16.msra.mxu0 %v1688
        %1792 = vmatpush.bf16.msra.mxu0 %v1681
        %1793 = vmatpush.bf16.msra.mxu0 %v1674
        %1794 = vmatmul.bf16.gmra.mxu0 %v1417
        %v1795 = vpop.f32.mrf.mxu0
        %v1796 = vadd.f32 %v1484, %v1795
        %v1797 = vpop.f32.mrf.mxu0
        %v1798 = vadd.f32 %v1484, %v1797
        %1799 = vdwg.mxu0
        %1800 = vmatpush.bf16.msra.mxu0 %v1724
        %1801 = vmatpush.bf16.msra.mxu0 %v1717
        %1802 = vmatpush.bf16.msra.mxu0 %v1710
        %1803 = vmatpush.bf16.msra.mxu0 %v1703
        %1804 = vmatpush.bf16.msra.mxu0 %v1696
        %1805 = vmatpush.bf16.msra.mxu0 %v1689
        %1806 = vmatpush.bf16.msra.mxu0 %v1682
        %1807 = vmatpush.bf16.msra.mxu0 %v1675
        %1808 = vmatmul.bf16.gmra.mxu0 %v1417
        %v1809 = vpop.f32.mrf.mxu0
        %v1810 = vadd.f32 %v1485, %v1809
        %v1811 = vpop.f32.mrf.mxu0
        %v1812 = vadd.f32 %v1485, %v1811
        %1813 = vdwg.mxu0
        %1814 = vmatpush.bf16.msra.mxu0 %v1725
        %1815 = vmatpush.bf16.msra.mxu0 %v1718
        %1816 = vmatpush.bf16.msra.mxu0 %v1711
        %1817 = vmatpush.bf16.msra.mxu0 %v1704
        %1818 = vmatpush.bf16.msra.mxu0 %v1697
        %1819 = vmatpush.bf16.msra.mxu0 %v1690
        %1820 = vmatpush.bf16.msra.mxu0 %v1683
        %1821 = vmatpush.bf16.msra.mxu0 %v1676
        %1822 = vmatmul.bf16.gmra.mxu0 %v1417
        %v1823 = vpop.f32.mrf.mxu0
        %v1824 = vadd.f32 %v1486, %v1823
        %v1825 = vpop.f32.mrf.mxu0
        %v1826 = vadd.f32 %v1486, %v1825
        %1827 = vdwg.mxu0
        %1828 = vmatpush.bf16.msra.mxu0 %v1726
        %1829 = vmatpush.bf16.msra.mxu0 %v1719
        %1830 = vmatpush.bf16.msra.mxu0 %v1712
        %1831 = vmatpush.bf16.msra.mxu0 %v1705
        %1832 = vmatpush.bf16.msra.mxu0 %v1698
        %1833 = vmatpush.bf16.msra.mxu0 %v1691
        %1834 = vmatpush.bf16.msra.mxu0 %v1684
        %1835 = vmatpush.bf16.msra.mxu0 %v1677
        %1836 = vmatmul.bf16.gmra.mxu0 %v1417
        %v1837 = vpop.f32.mrf.mxu0
        %v1838 = vadd.f32 %v1487, %v1837
        %v1839 = vpop.f32.mrf.mxu0
        %v1840 = vadd.f32 %v1487, %v1839
        %1841 = vdwg.mxu0
        %1842 = vmatpush.bf16.msra.mxu0 %v1727
        %1843 = vmatpush.bf16.msra.mxu0 %v1720
        %1844 = vmatpush.bf16.msra.mxu0 %v1713
        %1845 = vmatpush.bf16.msra.mxu0 %v1706
        %1846 = vmatpush.bf16.msra.mxu0 %v1699
        %1847 = vmatpush.bf16.msra.mxu0 %v1692
        %1848 = vmatpush.bf16.msra.mxu0 %v1685
        %1849 = vmatpush.bf16.msra.mxu0 %v1678
        %1850 = vmatmul.bf16.gmra.mxu0 %v1417
        %v1851 = vpop.f32.mrf.mxu0
        %v1852 = vadd.f32 %v1488, %v1851
        %v1853 = vpop.f32.mrf.mxu0
        %v1854 = vadd.f32 %v1488, %v1853
        %1855 = vdwg.mxu0
        %1856 = vmatpush.bf16.msra.mxu0 %v1728
        %1857 = vmatpush.bf16.msra.mxu0 %v1721
        %1858 = vmatpush.bf16.msra.mxu0 %v1714
        %1859 = vmatpush.bf16.msra.mxu0 %v1707
        %1860 = vmatpush.bf16.msra.mxu0 %v1700
        %1861 = vmatpush.bf16.msra.mxu0 %v1693
        %1862 = vmatpush.bf16.msra.mxu0 %v1686
        %1863 = vmatpush.bf16.msra.mxu0 %v1679
        %1864 = vmatmul.bf16.gmra.mxu0 %v1417
        %v1865 = vpop.f32.mrf.mxu0
        %v1866 = vadd.f32 %v1489, %v1865
        %v1867 = vpop.f32.mrf.mxu0
        %v1868 = vadd.f32 %v1489, %v1867
        %1869 = vdwg.mxu0
        %1870 = vmatpush.bf16.msra.mxu0 %v1729
        %1871 = vmatpush.bf16.msra.mxu0 %v1722
        %1872 = vmatpush.bf16.msra.mxu0 %v1715
        %1873 = vmatpush.bf16.msra.mxu0 %v1708
        %1874 = vmatpush.bf16.msra.mxu0 %v1701
        %1875 = vmatpush.bf16.msra.mxu0 %v1694
        %1876 = vmatpush.bf16.msra.mxu0 %v1687
        %1877 = vmatpush.bf16.msra.mxu0 %v1680
        %1878 = vmatmul.bf16.gmra.mxu0 %v1417
        %v1879 = vpop.f32.mrf.mxu0
        %v1880 = vadd.f32 %v1490, %v1879
        %v1881 = vpop.f32.mrf.mxu0
        %v1882 = vadd.f32 %v1490, %v1881
        %1883 = vdwg.mxu0
        %v1884 = vxor.u32 %v1796, 2147483648
        %v1885 = vxor.u32 %v1810, 2147483648
        %v1886 = vxor.u32 %v1824, 2147483648
        %v1887 = vxor.u32 %v1838, 2147483648
        %v1888 = vxor.u32 %v1852, 2147483648
        %v1889 = vxor.u32 %v1866, 2147483648
        %v1890 = vxor.u32 %v1880, 2147483648
        %v1891 = vxor.u32 %v1798, 2147483648
        %v1892 = vxor.u32 %v1812, 2147483648
        %v1893 = vxor.u32 %v1826, 2147483648
        %v1894 = vxor.u32 %v1840, 2147483648
        %v1895 = vxor.u32 %v1854, 2147483648
        %v1896 = vxor.u32 %v1868, 2147483648
        %v1897 = vxor.u32 %v1882, 2147483648
        %v1898 = vmul.f32 %v1884, 1.442695
        %v1899 = vpow.pop %v1898
        %v1900 = vmul.f32 %v1885, 1.442695
        %v1901 = vpow.pop %v1900
        %v1902 = vmul.f32 %v1886, 1.442695
        %v1903 = vpow.pop %v1902
        %v1904 = vmul.f32 %v1887, 1.442695
        %v1905 = vpow.pop %v1904
        %v1906 = vmul.f32 %v1888, 1.442695
        %v1907 = vpow.pop %v1906
        %v1908 = vmul.f32 %v1889, 1.442695
        %v1909 = vpow.pop %v1908
        %v1910 = vmul.f32 %v1890, 1.442695
        %v1911 = vpow.pop %v1910
        %v1912 = vmul.f32 %v1891, 1.442695
        %v1913 = vpow.pop %v1912
        %v1914 = vmul.f32 %v1892, 1.442695
        %v1915 = vpow.pop %v1914
        %v1916 = vmul.f32 %v1893, 1.442695
        %v1917 = vpow.pop %v1916
        %v1918 = vmul.f32 %v1894, 1.442695
        %v1919 = vpow.pop %v1918
        %v1920 = vmul.f32 %v1895, 1.442695
        %v1921 = vpow.pop %v1920
        %v1922 = vmul.f32 %v1896, 1.442695
        %v1923 = vpow.pop %v1922
        %v1924 = vmul.f32 %v1897, 1.442695
        %v1925 = vpow.pop %v1924
        %v1926 = vadd.f32 %v1899, 1.0
        %v1927 = vadd.f32 %v1901, 1.0
        %v1928 = vadd.f32 %v1903, 1.0
        %v1929 = vadd.f32 %v1905, 1.0
        %v1930 = vadd.f32 %v1907, 1.0
        %v1931 = vadd.f32 %v1909, 1.0
        %v1932 = vadd.f32 %v1911, 1.0
        %v1933 = vadd.f32 %v1913, 1.0
        %v1934 = vadd.f32 %v1915, 1.0
        %v1935 = vadd.f32 %v1917, 1.0
        %v1936 = vadd.f32 %v1919, 1.0
        %v1937 = vadd.f32 %v1921, 1.0
        %v1938 = vadd.f32 %v1923, 1.0
        %v1939 = vadd.f32 %v1925, 1.0
        %v1940 = vrcp.pop %v1926
        %v1941 = vmul.f32 %v1926, %v1940
        %v1942 = vsub.f32 1.0, %v1941
        %v1943 = vmul.f32 %v1940, %v1942
        %v1944 = vadd.f32 %v1940, %v1943
        %vm1945 = vweird.f32 %v1926
        %vm1946 = vweird.f32 %v1940
        %vm1947 = vmor %vm1945, %vm1946
        %v1948 = vsel %vm1947, %v1940, %v1944
        %v1949 = vand.u32 2147483647, %v1926
        %vm1950 = vcmp.eq.f32.partialorder %v1949, 8.507059e+37
        %v1951 = vand.u32 %v1926, 2147483648
        %v1952 = vor.u32 1.1754944e-38, %v1951
        %v1953 = vsel %vm1950, %v1952, %v1948
        %v1954 = vmul.f32 1.0, %v1953
        %v1955 = vrcp.pop %v1927
        %v1956 = vmul.f32 %v1927, %v1955
        %v1957 = vsub.f32 1.0, %v1956
        %v1958 = vmul.f32 %v1955, %v1957
        %v1959 = vadd.f32 %v1955, %v1958
        %vm1960 = vweird.f32 %v1927
        %vm1961 = vweird.f32 %v1955
        %vm1962 = vmor %vm1960, %vm1961
        %v1963 = vsel %vm1962, %v1955, %v1959
        %v1964 = vand.u32 2147483647, %v1927
        %vm1965 = vcmp.eq.f32.partialorder %v1964, 8.507059e+37
        %v1966 = vand.u32 %v1927, 2147483648
        %v1967 = vor.u32 1.1754944e-38, %v1966
        %v1968 = vsel %vm1965, %v1967, %v1963
        %v1969 = vmul.f32 1.0, %v1968
        %v1970 = vrcp.pop %v1928
        %v1971 = vmul.f32 %v1928, %v1970
        %v1972 = vsub.f32 1.0, %v1971
        %v1973 = vmul.f32 %v1970, %v1972
        %v1974 = vadd.f32 %v1970, %v1973
        %vm1975 = vweird.f32 %v1928
        %vm1976 = vweird.f32 %v1970
        %vm1977 = vmor %vm1975, %vm1976
        %v1978 = vsel %vm1977, %v1970, %v1974
        %v1979 = vand.u32 2147483647, %v1928
        %vm1980 = vcmp.eq.f32.partialorder %v1979, 8.507059e+37
        %v1981 = vand.u32 %v1928, 2147483648
        %v1982 = vor.u32 1.1754944e-38, %v1981
        %v1983 = vsel %vm1980, %v1982, %v1978
        %v1984 = vmul.f32 1.0, %v1983
        %v1985 = vrcp.pop %v1929
        %v1986 = vmul.f32 %v1929, %v1985
        %v1987 = vsub.f32 1.0, %v1986
        %v1988 = vmul.f32 %v1985, %v1987
        %v1989 = vadd.f32 %v1985, %v1988
        %vm1990 = vweird.f32 %v1929
        %vm1991 = vweird.f32 %v1985
        %vm1992 = vmor %vm1990, %vm1991
        %v1993 = vsel %vm1992, %v1985, %v1989
        %v1994 = vand.u32 2147483647, %v1929
        %vm1995 = vcmp.eq.f32.partialorder %v1994, 8.507059e+37
        %v1996 = vand.u32 %v1929, 2147483648
        %v1997 = vor.u32 1.1754944e-38, %v1996
        %v1998 = vsel %vm1995, %v1997, %v1993
        %v1999 = vmul.f32 1.0, %v1998
        %v2000 = vrcp.pop %v1930
        %v2001 = vmul.f32 %v1930, %v2000
        %v2002 = vsub.f32 1.0, %v2001
        %v2003 = vmul.f32 %v2000, %v2002
        %v2004 = vadd.f32 %v2000, %v2003
        %vm2005 = vweird.f32 %v1930
        %vm2006 = vweird.f32 %v2000
        %vm2007 = vmor %vm2005, %vm2006
        %v2008 = vsel %vm2007, %v2000, %v2004
        %v2009 = vand.u32 2147483647, %v1930
        %vm2010 = vcmp.eq.f32.partialorder %v2009, 8.507059e+37
        %v2011 = vand.u32 %v1930, 2147483648
        %v2012 = vor.u32 1.1754944e-38, %v2011
        %v2013 = vsel %vm2010, %v2012, %v2008
        %v2014 = vmul.f32 1.0, %v2013
        %v2015 = vrcp.pop %v1931
        %v2016 = vmul.f32 %v1931, %v2015
        %v2017 = vsub.f32 1.0, %v2016
        %v2018 = vmul.f32 %v2015, %v2017
        %v2019 = vadd.f32 %v2015, %v2018
        %vm2020 = vweird.f32 %v1931
        %vm2021 = vweird.f32 %v2015
        %vm2022 = vmor %vm2020, %vm2021
        %v2023 = vsel %vm2022, %v2015, %v2019
        %v2024 = vand.u32 2147483647, %v1931
        %vm2025 = vcmp.eq.f32.partialorder %v2024, 8.507059e+37
        %v2026 = vand.u32 %v1931, 2147483648
        %v2027 = vor.u32 1.1754944e-38, %v2026
        %v2028 = vsel %vm2025, %v2027, %v2023
        %v2029 = vmul.f32 1.0, %v2028
        %v2030 = vrcp.pop %v1932
        %v2031 = vmul.f32 %v1932, %v2030
        %v2032 = vsub.f32 1.0, %v2031
        %v2033 = vmul.f32 %v2030, %v2032
        %v2034 = vadd.f32 %v2030, %v2033
        %vm2035 = vweird.f32 %v1932
        %vm2036 = vweird.f32 %v2030
        %vm2037 = vmor %vm2035, %vm2036
        %v2038 = vsel %vm2037, %v2030, %v2034
        %v2039 = vand.u32 2147483647, %v1932
        %vm2040 = vcmp.eq.f32.partialorder %v2039, 8.507059e+37
        %v2041 = vand.u32 %v1932, 2147483648
        %v2042 = vor.u32 1.1754944e-38, %v2041
        %v2043 = vsel %vm2040, %v2042, %v2038
        %v2044 = vmul.f32 1.0, %v2043
        %v2045 = vrcp.pop %v1933
        %v2046 = vmul.f32 %v1933, %v2045
        %v2047 = vsub.f32 1.0, %v2046
        %v2048 = vmul.f32 %v2045, %v2047
        %v2049 = vadd.f32 %v2045, %v2048
        %vm2050 = vweird.f32 %v1933
        %vm2051 = vweird.f32 %v2045
        %vm2052 = vmor %vm2050, %vm2051
        %v2053 = vsel %vm2052, %v2045, %v2049
        %v2054 = vand.u32 2147483647, %v1933
        %vm2055 = vcmp.eq.f32.partialorder %v2054, 8.507059e+37
        %v2056 = vand.u32 %v1933, 2147483648
        %v2057 = vor.u32 1.1754944e-38, %v2056
        %v2058 = vsel %vm2055, %v2057, %v2053
        %v2059 = vmul.f32 1.0, %v2058
        %v2060 = vrcp.pop %v1934
        %v2061 = vmul.f32 %v1934, %v2060
        %v2062 = vsub.f32 1.0, %v2061
        %v2063 = vmul.f32 %v2060, %v2062
        %v2064 = vadd.f32 %v2060, %v2063
        %vm2065 = vweird.f32 %v1934
        %vm2066 = vweird.f32 %v2060
        %vm2067 = vmor %vm2065, %vm2066
        %v2068 = vsel %vm2067, %v2060, %v2064
        %v2069 = vand.u32 2147483647, %v1934
        %vm2070 = vcmp.eq.f32.partialorder %v2069, 8.507059e+37
        %v2071 = vand.u32 %v1934, 2147483648
        %v2072 = vor.u32 1.1754944e-38, %v2071
        %v2073 = vsel %vm2070, %v2072, %v2068
        %v2074 = vmul.f32 1.0, %v2073
        %v2075 = vrcp.pop %v1935
        %v2076 = vmul.f32 %v1935, %v2075
        %v2077 = vsub.f32 1.0, %v2076
        %v2078 = vmul.f32 %v2075, %v2077
        %v2079 = vadd.f32 %v2075, %v2078
        %vm2080 = vweird.f32 %v1935
        %vm2081 = vweird.f32 %v2075
        %vm2082 = vmor %vm2080, %vm2081
        %v2083 = vsel %vm2082, %v2075, %v2079
        %v2084 = vand.u32 2147483647, %v1935
        %vm2085 = vcmp.eq.f32.partialorder %v2084, 8.507059e+37
        %v2086 = vand.u32 %v1935, 2147483648
        %v2087 = vor.u32 1.1754944e-38, %v2086
        %v2088 = vsel %vm2085, %v2087, %v2083
        %v2089 = vmul.f32 1.0, %v2088
        %v2090 = vrcp.pop %v1936
        %v2091 = vmul.f32 %v1936, %v2090
        %v2092 = vsub.f32 1.0, %v2091
        %v2093 = vmul.f32 %v2090, %v2092
        %v2094 = vadd.f32 %v2090, %v2093
        %vm2095 = vweird.f32 %v1936
        %vm2096 = vweird.f32 %v2090
        %vm2097 = vmor %vm2095, %vm2096
        %v2098 = vsel %vm2097, %v2090, %v2094
        %v2099 = vand.u32 2147483647, %v1936
        %vm2100 = vcmp.eq.f32.partialorder %v2099, 8.507059e+37
        %v2101 = vand.u32 %v1936, 2147483648
        %v2102 = vor.u32 1.1754944e-38, %v2101
        %v2103 = vsel %vm2100, %v2102, %v2098
        %v2104 = vmul.f32 1.0, %v2103
        %v2105 = vrcp.pop %v1937
        %v2106 = vmul.f32 %v1937, %v2105
        %v2107 = vsub.f32 1.0, %v2106
        %v2108 = vmul.f32 %v2105, %v2107
        %v2109 = vadd.f32 %v2105, %v2108
        %vm2110 = vweird.f32 %v1937
        %vm2111 = vweird.f32 %v2105
        %vm2112 = vmor %vm2110, %vm2111
        %v2113 = vsel %vm2112, %v2105, %v2109
        %v2114 = vand.u32 2147483647, %v1937
        %vm2115 = vcmp.eq.f32.partialorder %v2114, 8.507059e+37
        %v2116 = vand.u32 %v1937, 2147483648
        %v2117 = vor.u32 1.1754944e-38, %v2116
        %v2118 = vsel %vm2115, %v2117, %v2113
        %v2119 = vmul.f32 1.0, %v2118
        %v2120 = vrcp.pop %v1938
        %v2121 = vmul.f32 %v1938, %v2120
        %v2122 = vsub.f32 1.0, %v2121
        %v2123 = vmul.f32 %v2120, %v2122
        %v2124 = vadd.f32 %v2120, %v2123
        %vm2125 = vweird.f32 %v1938
        %vm2126 = vweird.f32 %v2120
        %vm2127 = vmor %vm2125, %vm2126
        %v2128 = vsel %vm2127, %v2120, %v2124
        %v2129 = vand.u32 2147483647, %v1938
        %vm2130 = vcmp.eq.f32.partialorder %v2129, 8.507059e+37
        %v2131 = vand.u32 %v1938, 2147483648
        %v2132 = vor.u32 1.1754944e-38, %v2131
        %v2133 = vsel %vm2130, %v2132, %v2128
        %v2134 = vmul.f32 1.0, %v2133
        %v2135 = vrcp.pop %v1939
        %v2136 = vmul.f32 %v1939, %v2135
        %v2137 = vsub.f32 1.0, %v2136
        %v2138 = vmul.f32 %v2135, %v2137
        %v2139 = vadd.f32 %v2135, %v2138
        %vm2140 = vweird.f32 %v1939
        %vm2141 = vweird.f32 %v2135
        %vm2142 = vmor %vm2140, %vm2141
        %v2143 = vsel %vm2142, %v2135, %v2139
        %v2144 = vand.u32 2147483647, %v1939
        %vm2145 = vcmp.eq.f32.partialorder %v2144, 8.507059e+37
        %v2146 = vand.u32 %v1939, 2147483648
        %v2147 = vor.u32 1.1754944e-38, %v2146
        %v2148 = vsel %vm2145, %v2147, %v2143
        %v2149 = vmul.f32 1.0, %v2148
        %v2150 = vpack.c.bf16 %v1969, %v1954
        %v2151 = vpack.c.bf16 %v1999, %v1984
        %v2152 = vpack.c.bf16 %v2029, %v2014
        %v2153 = vpack.c.bf16 %v2044, %v2044
        %v2154 = vpack.c.bf16 %v2074, %v2059
        %v2155 = vpack.c.bf16 %v2104, %v2089
        %v2156 = vpack.c.bf16 %v2134, %v2119
        %v2157 = vpack.c.bf16 %v2149, %v2149
        %2158 = vst [vmem:[%s579] sm:$0xff] %v2150
        %2159 = vst [vmem:[%s579 + $0x8] sm:$0xff] %v2151
        %2160 = vst [vmem:[%s579 + $0x10] sm:$0xff] %v2152
        %vm2161 = vcmask 125952
        %2162 = vst.msk [vmem:[%s579 + $0x18] sm:$0xf] %vm2161, %v2153
        %2163 = vst [vmem:[%s579 + $0x1c] sm:$0xff] %v2154
        %2164 = vst [vmem:[%s579 + $0x24] sm:$0xff] %v2155
        %2165 = vst [vmem:[%s579 + $0x2c] sm:$0xff] %v2156
        %2166 = vst.msk [vmem:[%s579 + $0x34] sm:$0xf] %vm2161, %v2157
        %s2167 = smul.u32 2, %s33
        %p2168 = scmp.lt.s32.totalorder %s2167, 3
        %s2169 = scalar_select %p2168, %s2167, 3
        %s2170 = smul.addr %s2169, 8
        %s2171 = scalar_lea.vmem %s17, %s2170
        %s2172 = sand.u32 %s429, 1
        %s2173 = scalar_lea.sflag [#allocation3], %s2172
        %s2174 = sand.u32 %s429, 1
        %s2175 = smul.addr %s2174, 56
        %s2176 = scalar_lea.vmem [#allocation2], %s2175
        // Predicated region
        $region89: #{autoencoder_forward.1} parent=87 // pred_check
          %p2177 = pneg %p413
        $region90: #{autoencoder_forward.1} parent=87 // pred_check_branch
          %2179 = sbr.rel (%p2177) target = $region92
        $region91: #{autoencoder_forward.1} parent=87 // pred_region
          %s2180 = smul.u32 2, %s33
        $region92: #{autoencoder_forward.1} parent=87 // pred_fallthru
          _
        // Predicated region
        $region93: #{autoencoder_forward.1} parent=87 // pred_check
          %p2181 = pneg %p439
        $region94: #{autoencoder_forward.1} parent=87 // pred_check_branch
          %2183 = sbr.rel (%p2181) target = $region96
        $region95: #{autoencoder_forward.1} parent=87 // pred_region
          %s2184 = smul.u32 2, %s33
          %2186 = vsyncadd %s2173, 0
          %s2187 = smul.addr %s2184, 7
          %s2188 = smul.addr %s2187, 4
          %s2189 = scalar_lea.hbm %s18, %s2188
          %s2190 = sshll.u32 %s2176, 4
          %s2191 = int_to_ptr.vmem [resolvable:$true] %s2190
          %s2192 = sshll.u32 %s2189, 4
          %s2193 = int_to_ptr.hbm [resolvable:$true] %s2192
          %2198 = dma.vmem_to_hbm [thread:$0]  %s2191, 896, %s2193, %s2173, 448, 448, 28
        $region96: #{autoencoder_forward.1} parent=87 // pred_fallthru
          _
      $region88: #{autoencoder_forward.1} parent=5 // pred_fallthru
        _
      %p2199 = scmp.le.s32.totalorder 2, %s28
      // Predicated region
      $region97: #{autoencoder_forward.1} parent=5 // pred_check
        %p2200 = pneg %p2199
      $region98: #{autoencoder_forward.1} parent=5 // pred_check_branch
        %2202 = sbr.rel (%p2200) target = $region100
      $region99: #{autoencoder_forward.1} parent=5 // pred_region
        %s2203 = ssub.s32 %s28, 2
        // Predicated region
        $region101: #{autoencoder_forward.1} parent=99 // pred_check
          %p2204 = pneg %p419
        $region102: #{autoencoder_forward.1} parent=99 // pred_check_branch
          %2206 = sbr.rel (%p2204) target = $region104
        $region103: #{autoencoder_forward.1} parent=99 // pred_region
          %s2207 = smul.u32 2, %s34
          %p2208 = scmp.lt.s32.totalorder %s2207, 3
          %s2209 = scalar_select %p2208, %s2207, 3
          %s2210 = smul.addr %s2209, 8
          %s2211 = scalar_lea.vmem %s17, %s2210
        $region104: #{autoencoder_forward.1} parent=99 // pred_fallthru
          _
        // Predicated region
        $region105: #{autoencoder_forward.1} parent=99 // pred_check
          %p2212 = pneg %p445
        $region106: #{autoencoder_forward.1} parent=99 // pred_check_branch
          %2214 = sbr.rel (%p2212) target = $region108
        $region107: #{autoencoder_forward.1} parent=99 // pred_region
          %s2215 = sand.u32 %s430, 1
          %s2216 = scalar_lea.sflag [#allocation3], %s2215
          %s2217 = sand.u32 %s430, 1
          %s2218 = smul.addr %s2217, 56
          %s2219 = scalar_lea.vmem [#allocation2], %s2218
          %2221 = dma.done %s2216, 896
        $region108: #{autoencoder_forward.1} parent=99 // pred_fallthru
          _
      $region100: #{autoencoder_forward.1} parent=5 // pred_fallthru
        _
    $region6: #{autoencoder_forward.1} parent=1 // loop_footer
      %s32 = sadd.s32 1, %s28
    $region7: #{autoencoder_forward.1} parent=1 // loop_footer_branch
      %27 = sbr.rel target = $region3
    $region8: #{autoencoder_forward.1} parent=1 // loop_exit
      _
    %2222 = vsyncpa [#allocation3], 1
    %s2223 = scalar_lea.sflag [#allocation3], 1
    %2224 = vsyncpa %s2223, 1

</llo_original>
